<compile_context>
chip_gen: v5e
topology: v5e:2x2
jax: 0.10.0
libtpu: 0.0.40
codegen_flags: <defaults>
</compile_context>

<pallas_src>
import functools

import jax
import jax.numpy as jnp
from jax import lax
from jax.experimental import pallas as pl
from jax.experimental.pallas import tpu as pltpu
from jax.scipy.special import logsumexp

_TINY = float(jnp.finfo(jnp.float32).tiny)  # guard log(0) if trans has huge range


def _crf_step(t, alpha, oh_prev, gold, *, feats_ref, tags_ref, mask_ref,
              etT, cT, transT, iota):
    """One recursion + gold-score step at local timestep t (batch on lanes)."""
    feats_t = feats_ref[t]                         # (T, bB)  per-step load
    mask_t = mask_ref[pl.ds(t, 1), :]              # (1, bB)
    tags_t = tags_ref[pl.ds(t, 1), :]              # (1, bB) int32
    oh_t = (iota == tags_t).astype(jnp.float32)    # (T, bB) one-hot of gold tag
    live = mask_t != 0.0                           # (1, bB)

    # ---- normalizer: alpha[to] = logsumexp_f(alpha[f] + trans[f,to]) + emit[to]
    m = jnp.max(alpha, axis=0, keepdims=True)                                  # (1,bB)
    s = jnp.dot(etT, jnp.exp(alpha - m), preferred_element_type=jnp.float32)   # (T,bB) MXU
    new = jnp.log(jnp.maximum(s, _TINY)) + m + cT + feats_t
    alpha = jnp.where(live, new, alpha)

    # ---- gold: emission feats[t, tags[t]] + transition trans[tags[t-1], tags[t]]
    emit = jnp.sum(feats_t * oh_t, axis=0, keepdims=True)                      # (1,bB)
    rows = jnp.dot(transT, oh_prev, preferred_element_type=jnp.float32)        # (T,bB) MXU
    tsc = jnp.sum(rows * oh_t, axis=0, keepdims=True)                          # (1,bB)
    gold = gold + jnp.where(live, emit + tsc, 0.0)
    return alpha, oh_t, gold


def crf_loss_kernel(feats_ref, tags_ref, mask_ref, etT_ref, cT_ref, transT_ref,
                    out_ref, alpha_s, gold_s, ohprev_s):
    il = pl.program_id(1)                          # time-block index (innermost)
    nl = pl.num_programs(1)
    bL = feats_ref.shape[0]
    T, bB = alpha_s.shape

    # tiny loop-invariant constants (precomputed in the wrapper, loaded once)
    etT = etT_ref[...]                             # (T, T)  exp(trans - colmax).T
    cT = cT_ref[...]                               # (T, 1)  per-'to' column max
    transT = transT_ref[...]                       # (T, T)  trans.T
    iota = lax.broadcasted_iota(jnp.int32, (T, bB), 0)   # hoisted out of the loop

    step = functools.partial(_crf_step, feats_ref=feats_ref, tags_ref=tags_ref,
                             mask_ref=mask_ref, etT=etT, cT=cT, transT=transT,
                             iota=iota)

    # ---- first local timestep: init at the first time block, else a normal
    #      recursion step using the carried alpha / prev-tag one-hot.
    @pl.when(il == 0)
    def _init():
        feats0 = feats_ref[0]
        tags0 = tags_ref[pl.ds(0, 1), :]
        mask0 = mask_ref[pl.ds(0, 1), :]
        oh0 = (iota == tags0).astype(jnp.float32)
        alpha_s[...] = feats0                                   # alpha_0 = feats[0]
        ohprev_s[...] = oh0
        emit0 = jnp.sum(feats0 * oh0, axis=0, keepdims=True)
        gold_s[...] = jnp.where(mask0 != 0.0, emit0, 0.0)       # emission only at t=0

    @pl.when(il > 0)
    def _boundary_step():
        a, oh, g = step(0, alpha_s[...], ohprev_s[...], gold_s[...])
        alpha_s[...] = a
        ohprev_s[...] = oh
        gold_s[...] = g

    # ---- remaining timesteps of this block (bounded live ranges via fori_loop)
    def body(t, carry):
        return step(t, *carry)

    alpha, oh_prev, gold = lax.fori_loop(
        1, bL, body, (alpha_s[...], ohprev_s[...], gold_s[...]), unroll=True)
    alpha_s[...] = alpha
    ohprev_s[...] = oh_prev
    gold_s[...] = gold

    # ---- finalize: loss = logZ - gold, lane-dense (1, bB) store
    @pl.when(il == nl - 1)
    def _finalize():
        m = jnp.max(alpha, axis=0, keepdims=True)
        norm = jnp.log(jnp.sum(jnp.exp(alpha - m), axis=0, keepdims=True)) + m
        out_ref[...] = norm - gold


def crf_forward(feats, tags, mask, trans, *, block_b=None, block_l=None):
    """feats (B,L,T) f32, tags (B,L) int, mask (B,L) {0,1}, trans (T,T) f32 -> (B,) f32."""
    B, L, T = feats.shape

    # ---- block sizes --------------------------------------------------------
    if block_b is None:
        # Small batches: one full-batch block (lane padding is unavoidable).
        # Large batches: 128-lane multiples so the 'parallel' axis has >=2
        # blocks (both v7x TensorCores busy) and the MXU N dim stays full.
        block_b = B if B <= 128 else 128
    if block_b != B:
        assert block_b % 128 == 0, "batch block must be a multiple of 128 (or the full batch)"
    if block_l is None:
        block_l = min(32, ((L + 7) // 8) * 8)
    assert block_l % 8 == 0
    # keep the double-buffered feats block well inside VMEM (v7x has only 64 MiB)
    while block_l > 8 and 2 * block_l * T * block_b * 4 > 16 * 1024 * 1024:
        block_l //= 2

    B_pad = ((B + block_b - 1) // block_b) * block_b
    L_pad = ((L + block_l - 1) // block_l) * block_l

    feats = feats.astype(jnp.float32)
    tags = tags.astype(jnp.int32)
    mask = mask.astype(jnp.float32)
    if B_pad != B or L_pad != L:          # padded rows/steps carry mask==0 -> no-ops
        feats = jnp.pad(feats, ((0, B_pad - B), (0, L_pad - L), (0, 0)))
        tags = jnp.pad(tags, ((0, B_pad - B), (0, L_pad - L)))
        mask = jnp.pad(mask, ((0, B_pad - B), (0, L_pad - L)))

    # batch-on-lanes layouts (single wrapper-side transpose, amortized by XLA)
    feats_ltb = jnp.transpose(feats, (1, 2, 0))     # (L, T, B)
    tags_lb = jnp.transpose(tags, (1, 0))           # (L, B)
    mask_lb = jnp.transpose(mask, (1, 0))           # (L, B)

    trans = trans.astype(jnp.float32)
    c = jnp.max(trans, axis=0)                      # (T,)  per-'to' column max
    etT = jnp.exp(trans - c[None, :]).T             # (T,T) etT[to,f] = exp(trans[f,to]-c[to])
    cT = c[:, None]                                 # (T,1)
    transT = jnp.transpose(trans)                   # (T,T)

    nb, nl = B_pad // block_b, L_pad // block_l

    out = pl.pallas_call(
        crf_loss_kernel,
        out_shape=jax.ShapeDtypeStruct((1, B_pad), jnp.float32),
        grid=(nb, nl),
        in_specs=[
            pl.BlockSpec((block_l, T, block_b), lambda b, l: (l, 0, b)),
            pl.BlockSpec((block_l, block_b), lambda b, l: (l, b)),
            pl.BlockSpec((block_l, block_b), lambda b, l: (l, b)),
            pl.BlockSpec((T, T), lambda b, l: (0, 0)),
            pl.BlockSpec((T, 1), lambda b, l: (0, 0)),
            pl.BlockSpec((T, T), lambda b, l: (0, 0)),
        ],
        out_specs=pl.BlockSpec((1, block_b), lambda b, l: (0, b)),
        scratch_shapes=[
            pltpu.VMEM((T, block_b), jnp.float32),   # alpha carry
            pltpu.VMEM((1, block_b), jnp.float32),   # gold-score accumulator
            pltpu.VMEM((T, block_b), jnp.float32),   # one-hot(tags) of previous step
        ],
        compiler_params=pltpu.CompilerParams(
            dimension_semantics=("parallel", "arbitrary"),
            vmem_limit_bytes=32 * 1024 * 1024),
    )(feats_ltb, tags_lb, mask_lb, etT, cT, transT)
    return out[0, :B]


def crf_forward_ref(feats_blt, tags_bl, mask_bl, trans):
    """Pure-JAX reference mirroring the PyTorch module exactly."""
    feats = jnp.transpose(feats_blt, (1, 0, 2)).astype(jnp.float32)
    tags = jnp.transpose(tags_bl, (1, 0)).astype(jnp.int32)
    mask = jnp.transpose(mask_bl, (1, 0)).astype(jnp.float32)
    L, B, T = feats.shape

    alpha = feats[0]
    for i in range(1, L):
        tmp = alpha[:, :, None] + feats[i][:, None, :] + trans[None, :, :]
        lse = logsumexp(tmp, axis=1)
        mi = mask[i][:, None]
        alpha = jnp.where(mi == 0.0, 0.0, lse) + jnp.where(mi == 1.0, 0.0, alpha)
    norm = logsumexp(alpha, axis=1)

    trans_score = trans[tags[:-1], tags[1:]]
    trans_score = jnp.where(mask[1:] == 0.0, 0.0, trans_score)
    emit = jnp.take_along_axis(feats, tags[:, :, None], axis=2)[..., 0]
    emit = jnp.where(mask == 0.0, 0.0, emit)
    gold = jnp.sum(trans_score + emit[:-1], axis=0) + jnp.where(
        mask[-1] == 0.0, 0.0, emit[-1])
    return norm - gold


if __name__ == "__main__":
    B, L, T = 8, 16, 8  # batch, max_len, num_tags

    key = jax.random.PRNGKey(0)
    k_feats, k_tags, k_trans = jax.random.split(key, 3)

    feats = jax.random.normal(k_feats, (B, L, T), dtype=jnp.float32)
    tags = jax.random.randint(k_tags, (B, L), 0, T, dtype=jnp.int32)
    lengths = jnp.array([16, 11, 9, 16, 5, 8, 13, 1], dtype=jnp.int32)
    mask = (jnp.arange(L)[None, :] < lengths[:, None]).astype(jnp.float32)  # (B, L)

    # deterministic parameter init (trans_m ~ randn in the PyTorch module)
    trans_m = jax.random.normal(k_trans, (T, T), dtype=jnp.float32)

    ref = crf_forward_ref(feats, tags, mask, trans_m)

    # single time-block path
    loss1 = jax.block_until_ready(crf_forward(feats, tags, mask, trans_m))
    # multi time-block path (exercises the alpha / gold / prev-tag carries)
    loss2 = jax.block_until_ready(crf_forward(feats, tags, mask, trans_m, block_l=8))

    assert loss1.shape == (B,)
    assert jnp.allclose(loss1, ref, atol=1e-4, rtol=1e-4), (loss1, ref)
    assert jnp.allclose(loss2, ref, atol=1e-4, rtol=1e-4), (loss2, ref)

    print("KERNEL_OK")
</pallas_src>

<mosaic_0001>
module attributes {stable_mosaic.version = 11 : i64} {
  func.func @crf_loss_kernel(%arg0: i32, %arg1: i32, %arg2: memref<16x8x8xf32, #tpu.memory_space<vmem>>, %arg3: memref<16x8xi32, #tpu.memory_space<vmem>>, %arg4: memref<16x8xf32, #tpu.memory_space<vmem>>, %arg5: memref<8x8xf32, #tpu.memory_space<vmem>>, %arg6: memref<8x1xf32, #tpu.memory_space<vmem>>, %arg7: memref<8x8xf32, #tpu.memory_space<vmem>>, %arg8: memref<1x8xf32, #tpu.memory_space<vmem>>, %arg9: memref<8x8xf32, #tpu.memory_space<vmem>>, %arg10: memref<1x8xf32, #tpu.memory_space<vmem>>, %arg11: memref<8x8xf32, #tpu.memory_space<vmem>>) attributes {dimension_semantics = [#tpu.dimension_semantics<parallel>, #tpu.dimension_semantics<arbitrary>], iteration_bounds = array<i64: 1, 1>, scalar_prefetch = 0 : i64, scratch_operands = 3 : i64, tpu.core_type = #tpu.core_type<tc>, window_params = [{transform_indices = @transform_0, window_bounds = array<i64: 16, 8, 8>}, {transform_indices = @transform_1, window_bounds = array<i64: 16, 8>}, {transform_indices = @transform_2, window_bounds = array<i64: 16, 8>}, {pipeline_mode = #tpu.pipeline_mode<synchronous>, transform_indices = @transform_3, window_bounds = array<i64: 8, 8>}, {pipeline_mode = #tpu.pipeline_mode<synchronous>, transform_indices = @transform_4, window_bounds = array<i64: 8, 1>}, {pipeline_mode = #tpu.pipeline_mode<synchronous>, transform_indices = @transform_5, window_bounds = array<i64: 8, 8>}, {transform_indices = @transform_6, window_bounds = array<i64: 1, 8>}]} {
    %c0 = arith.constant 0 : index
    %c0_0 = arith.constant 0 : index
    %0 = vector.load %arg5[%c0, %c0_0] : memref<8x8xf32, #tpu.memory_space<vmem>>, vector<8x8xf32>
    %c0_1 = arith.constant 0 : index
    %c0_2 = arith.constant 0 : index
    %1 = vector.load %arg6[%c0_1, %c0_2] : memref<8x1xf32, #tpu.memory_space<vmem>>, vector<8x1xf32>
    %c0_3 = arith.constant 0 : index
    %c0_4 = arith.constant 0 : index
    %2 = vector.load %arg7[%c0_3, %c0_4] : memref<8x8xf32, #tpu.memory_space<vmem>>, vector<8x8xf32>
    %3 = tpu.iota {dimensions = array<i32: 0>} : vector<8x8xi32>
    %c0_i32 = arith.constant 0 : i32
    %4 = arith.cmpi eq, %arg1, %c0_i32 : i32
    %5 = arith.extui %4 : i1 to i32
    %c0_i32_5 = arith.constant 0 : i32
    %6 = arith.cmpi ne, %5, %c0_i32_5 : i32
    scf.if %6 {
      %c0_202 = arith.constant 0 : index
      %c0_203 = arith.constant 0 : index
      %c0_204 = arith.constant 0 : index
      %634 = vector.load %arg2[%c0_202, %c0_203, %c0_204] : memref<16x8x8xf32, #tpu.memory_space<vmem>>, vector<1x8x8xf32>
      %635 = vector.shape_cast %634 : vector<1x8x8xf32> to vector<8x8xf32>
      %c0_205 = arith.constant 0 : index
      %c0_206 = arith.constant 0 : index
      %636 = vector.load %arg3[%c0_205, %c0_206] : memref<16x8xi32, #tpu.memory_space<vmem>>, vector<1x8xi32>
      %c0_207 = arith.constant 0 : index
      %c0_208 = arith.constant 0 : index
      %637 = vector.load %arg4[%c0_207, %c0_208] : memref<16x8xf32, #tpu.memory_space<vmem>>, vector<1x8xf32>
      %638 = vector.broadcast %636 : vector<1x8xi32> to vector<8x8xi32>
      %639 = arith.cmpi eq, %3, %638 : vector<8x8xi32>
      %640 = arith.extui %639 : vector<8x8xi1> to vector<8x8xi32>
      %641 = arith.sitofp %640 : vector<8x8xi32> to vector<8x8xf32>
      %c0_209 = arith.constant 0 : index
      %c0_210 = arith.constant 0 : index
      %642 = vector.load %arg9[%c0_209, %c0_210] : memref<8x8xf32, #tpu.memory_space<vmem>>, vector<8x8xf32>
      tpu.vector_store %arg9[%c0_209, %c0_210], %635 {strides = array<i32>} : memref<8x8xf32, #tpu.memory_space<vmem>>, vector<8x8xf32>,
      %c0_211 = arith.constant 0 : index
      %c0_212 = arith.constant 0 : index
      %643 = vector.load %arg11[%c0_211, %c0_212] : memref<8x8xf32, #tpu.memory_space<vmem>>, vector<8x8xf32>
      tpu.vector_store %arg11[%c0_211, %c0_212], %641 {strides = array<i32>} : memref<8x8xf32, #tpu.memory_space<vmem>>, vector<8x8xf32>,
      %644 = arith.mulf %635, %641 : vector<8x8xf32>
      %cst_213 = arith.constant dense<0.000000e+00> : vector<8xf32>
      %645 = vector.multi_reduction <add>, %644, %cst_213 [0] : vector<8x8xf32> to vector<8xf32>
      %646 = vector.shape_cast %645 : vector<8xf32> to vector<1x8xf32>
      %cst_214 = arith.constant 0.000000e+00 : f32
      %647 = vector.broadcast %cst_214 : f32 to vector<1x8xf32>
      %648 = arith.cmpf one, %637, %647 : vector<1x8xf32>
      %cst_215 = arith.constant 0.000000e+00 : f32
      %649 = vector.broadcast %cst_215 : f32 to vector<1x8xf32>
      %650 = arith.select %648, %646, %649 : vector<1x8xi1>, vector<1x8xf32>
      %c0_216 = arith.constant 0 : index
      %c0_217 = arith.constant 0 : index
      %651 = vector.load %arg10[%c0_216, %c0_217] : memref<1x8xf32, #tpu.memory_space<vmem>>, vector<1x8xf32>
      tpu.vector_store %arg10[%c0_216, %c0_217], %650 {strides = array<i32>} : memref<1x8xf32, #tpu.memory_space<vmem>>, vector<1x8xf32>,
    } else {
    }
    %c0_i32_6 = arith.constant 0 : i32
    %7 = arith.cmpi sgt, %arg1, %c0_i32_6 : i32
    %8 = arith.extui %7 : i1 to i32
    %c0_i32_7 = arith.constant 0 : i32
    %9 = arith.cmpi ne, %8, %c0_i32_7 : i32
    scf.if %9 {
      %c0_202 = arith.constant 0 : index
      %c0_203 = arith.constant 0 : index
      %634 = vector.load %arg9[%c0_202, %c0_203] : memref<8x8xf32, #tpu.memory_space<vmem>>, vector<8x8xf32>
      %c0_204 = arith.constant 0 : index
      %c0_205 = arith.constant 0 : index
      %635 = vector.load %arg11[%c0_204, %c0_205] : memref<8x8xf32, #tpu.memory_space<vmem>>, vector<8x8xf32>
      %c0_206 = arith.constant 0 : index
      %c0_207 = arith.constant 0 : index
      %636 = vector.load %arg10[%c0_206, %c0_207] : memref<1x8xf32, #tpu.memory_space<vmem>>, vector<1x8xf32>
      %c0_208 = arith.constant 0 : index
      %c0_209 = arith.constant 0 : index
      %c0_210 = arith.constant 0 : index
      %637 = vector.load %arg2[%c0_208, %c0_209, %c0_210] : memref<16x8x8xf32, #tpu.memory_space<vmem>>, vector<1x8x8xf32>
      %638 = vector.shape_cast %637 : vector<1x8x8xf32> to vector<8x8xf32>
      %c0_211 = arith.constant 0 : index
      %c0_212 = arith.constant 0 : index
      %639 = vector.load %arg4[%c0_211, %c0_212] : memref<16x8xf32, #tpu.memory_space<vmem>>, vector<1x8xf32>
      %c0_213 = arith.constant 0 : index
      %c0_214 = arith.constant 0 : index
      %640 = vector.load %arg3[%c0_213, %c0_214] : memref<16x8xi32, #tpu.memory_space<vmem>>, vector<1x8xi32>
      %641 = vector.broadcast %640 : vector<1x8xi32> to vector<8x8xi32>
      %642 = arith.cmpi eq, %3, %641 : vector<8x8xi32>
      %643 = arith.extui %642 : vector<8x8xi1> to vector<8x8xi32>
      %644 = arith.sitofp %643 : vector<8x8xi32> to vector<8x8xf32>
      %cst_215 = arith.constant 0.000000e+00 : f32
      %645 = vector.broadcast %cst_215 : f32 to vector<1x8xf32>
      %646 = arith.cmpf one, %639, %645 : vector<1x8xf32>
      %cst_216 = arith.constant dense<0xFF800000> : vector<8xf32>
      %647 = vector.multi_reduction <maximumf>, %634, %cst_216 [0] : vector<8x8xf32> to vector<8xf32>
      %648 = vector.shape_cast %647 : vector<8xf32> to vector<1x8xf32>
      %649 = vector.broadcast %648 : vector<1x8xf32> to vector<8x8xf32>
      %650 = arith.subf %634, %649 : vector<8x8xf32>
      %651 = math.exp %650 : vector<8x8xf32>
      %cst_217 = arith.constant dense<0.000000e+00> : vector<8x8xf32>
      %652 = tpu.matmul %0, %651, %cst_217 {dimension_numbers = #tpu.dot_dimension_numbers<[1], [0], [0], [1], [0, 0, 1, 1], [], []>} : vector<8x8xf32>, vector<8x8xf32>, vector<8x8xf32> -> vector<8x8xf32>
      %cst_218 = arith.constant 1.17549435E-38 : f32
      %653 = vector.broadcast %cst_218 : f32 to vector<8x8xf32>
      %654 = arith.maximumf %652, %653 : vector<8x8xf32>
      %655 = math.log %654 : vector<8x8xf32>
      %656 = vector.broadcast %648 : vector<1x8xf32> to vector<8x8xf32>
      %657 = arith.addf %655, %656 : vector<8x8xf32>
      %658 = vector.broadcast %1 : vector<8x1xf32> to vector<8x8xf32>
      %659 = arith.addf %657, %658 : vector<8x8xf32>
      %660 = arith.addf %659, %638 : vector<8x8xf32>
      %661 = vector.shape_cast %646 : vector<1x8xi1> to vector<1x8xi1>
      %662 = vector.broadcast %661 : vector<1x8xi1> to vector<8x8xi1>
      %663 = arith.select %662, %660, %634 : vector<8x8xi1>, vector<8x8xf32>
      %664 = arith.mulf %638, %644 : vector<8x8xf32>
      %cst_219 = arith.constant dense<0.000000e+00> : vector<8xf32>
      %665 = vector.multi_reduction <add>, %664, %cst_219 [0] : vector<8x8xf32> to vector<8xf32>
      %666 = vector.shape_cast %665 : vector<8xf32> to vector<1x8xf32>
      %cst_220 = arith.constant dense<0.000000e+00> : vector<8x8xf32>
      %667 = tpu.matmul %2, %635, %cst_220 {dimension_numbers = #tpu.dot_dimension_numbers<[1], [0], [0], [1], [0, 0, 1, 1], [], []>} : vector<8x8xf32>, vector<8x8xf32>, vector<8x8xf32> -> vector<8x8xf32>
      %668 = arith.mulf %667, %644 : vector<8x8xf32>
      %cst_221 = arith.constant dense<0.000000e+00> : vector<8xf32>
      %669 = vector.multi_reduction <add>, %668, %cst_221 [0] : vector<8x8xf32> to vector<8xf32>
      %670 = vector.shape_cast %669 : vector<8xf32> to vector<1x8xf32>
      %671 = arith.addf %666, %670 : vector<1x8xf32>
      %cst_222 = arith.constant 0.000000e+00 : f32
      %672 = vector.broadcast %cst_222 : f32 to vector<1x8xf32>
      %673 = arith.select %646, %671, %672 : vector<1x8xi1>, vector<1x8xf32>
      %674 = arith.addf %636, %673 : vector<1x8xf32>
      %c0_223 = arith.constant 0 : index
      %c0_224 = arith.constant 0 : index
      %675 = vector.load %arg9[%c0_223, %c0_224] : memref<8x8xf32, #tpu.memory_space<vmem>>, vector<8x8xf32>
      tpu.vector_store %arg9[%c0_223, %c0_224], %663 {strides = array<i32>} : memref<8x8xf32, #tpu.memory_space<vmem>>, vector<8x8xf32>,
      %c0_225 = arith.constant 0 : index
      %c0_226 = arith.constant 0 : index
      %676 = vector.load %arg11[%c0_225, %c0_226] : memref<8x8xf32, #tpu.memory_space<vmem>>, vector<8x8xf32>
      tpu.vector_store %arg11[%c0_225, %c0_226], %644 {strides = array<i32>} : memref<8x8xf32, #tpu.memory_space<vmem>>, vector<8x8xf32>,
      %c0_227 = arith.constant 0 : index
      %c0_228 = arith.constant 0 : index
      %677 = vector.load %arg10[%c0_227, %c0_228] : memref<1x8xf32, #tpu.memory_space<vmem>>, vector<1x8xf32>
      tpu.vector_store %arg10[%c0_227, %c0_228], %674 {strides = array<i32>} : memref<1x8xf32, #tpu.memory_space<vmem>>, vector<1x8xf32>,
    } else {
    }
    %c0_8 = arith.constant 0 : index
    %c0_9 = arith.constant 0 : index
    %10 = vector.load %arg9[%c0_8, %c0_9] : memref<8x8xf32, #tpu.memory_space<vmem>>, vector<8x8xf32>
    %c0_10 = arith.constant 0 : index
    %c0_11 = arith.constant 0 : index
    %11 = vector.load %arg11[%c0_10, %c0_11] : memref<8x8xf32, #tpu.memory_space<vmem>>, vector<8x8xf32>
    %c0_12 = arith.constant 0 : index
    %c0_13 = arith.constant 0 : index
    %12 = vector.load %arg10[%c0_12, %c0_13] : memref<1x8xf32, #tpu.memory_space<vmem>>, vector<1x8xf32>
    %c1_i32 = arith.constant 1 : i32
    %13 = arith.index_cast %c1_i32 : i32 to index
    %c0_14 = arith.constant 0 : index
    %c0_15 = arith.constant 0 : index
    %14 = vector.load %arg2[%13, %c0_14, %c0_15] : memref<16x8x8xf32, #tpu.memory_space<vmem>>, vector<1x8x8xf32>
    %15 = vector.shape_cast %14 : vector<1x8x8xf32> to vector<8x8xf32>
    %16 = arith.index_cast %c1_i32 : i32 to index
    %c0_16 = arith.constant 0 : index
    %17 = vector.load %arg4[%16, %c0_16] : memref<16x8xf32, #tpu.memory_space<vmem>>, vector<1x8xf32>
    %18 = arith.index_cast %c1_i32 : i32 to index
    %c0_17 = arith.constant 0 : index
    %19 = vector.load %arg3[%18, %c0_17] : memref<16x8xi32, #tpu.memory_space<vmem>>, vector<1x8xi32>
    %20 = vector.broadcast %19 : vector<1x8xi32> to vector<8x8xi32>
    %21 = arith.cmpi eq, %3, %20 : vector<8x8xi32>
    %22 = arith.extui %21 : vector<8x8xi1> to vector<8x8xi32>
    %23 = arith.sitofp %22 : vector<8x8xi32> to vector<8x8xf32>
    %cst = arith.constant 0.000000e+00 : f32
    %24 = vector.broadcast %cst : f32 to vector<1x8xf32>
    %25 = arith.cmpf one, %17, %24 : vector<1x8xf32>
    %cst_18 = arith.constant dense<0xFF800000> : vector<8xf32>
    %26 = vector.multi_reduction <maximumf>, %10, %cst_18 [0] : vector<8x8xf32> to vector<8xf32>
    %27 = vector.shape_cast %26 : vector<8xf32> to vector<1x8xf32>
    %28 = vector.broadcast %27 : vector<1x8xf32> to vector<8x8xf32>
    %29 = arith.subf %10, %28 : vector<8x8xf32>
    %30 = math.exp %29 : vector<8x8xf32>
    %cst_19 = arith.constant dense<0.000000e+00> : vector<8x8xf32>
    %31 = tpu.matmul %0, %30, %cst_19 {dimension_numbers = #tpu.dot_dimension_numbers<[1], [0], [0], [1], [0, 0, 1, 1], [], []>} : vector<8x8xf32>, vector<8x8xf32>, vector<8x8xf32> -> vector<8x8xf32>
    %cst_20 = arith.constant 1.17549435E-38 : f32
    %32 = vector.broadcast %cst_20 : f32 to vector<8x8xf32>
    %33 = arith.maximumf %31, %32 : vector<8x8xf32>
    %34 = math.log %33 : vector<8x8xf32>
    %35 = vector.broadcast %27 : vector<1x8xf32> to vector<8x8xf32>
    %36 = arith.addf %34, %35 : vector<8x8xf32>
    %37 = vector.broadcast %1 : vector<8x1xf32> to vector<8x8xf32>
    %38 = arith.addf %36, %37 : vector<8x8xf32>
    %39 = arith.addf %38, %15 : vector<8x8xf32>
    %40 = vector.shape_cast %25 : vector<1x8xi1> to vector<1x8xi1>
    %41 = vector.broadcast %40 : vector<1x8xi1> to vector<8x8xi1>
    %42 = arith.select %41, %39, %10 : vector<8x8xi1>, vector<8x8xf32>
    %43 = arith.mulf %15, %23 : vector<8x8xf32>
    %cst_21 = arith.constant dense<0.000000e+00> : vector<8xf32>
    %44 = vector.multi_reduction <add>, %43, %cst_21 [0] : vector<8x8xf32> to vector<8xf32>
    %45 = vector.shape_cast %44 : vector<8xf32> to vector<1x8xf32>
    %cst_22 = arith.constant dense<0.000000e+00> : vector<8x8xf32>
    %46 = tpu.matmul %2, %11, %cst_22 {dimension_numbers = #tpu.dot_dimension_numbers<[1], [0], [0], [1], [0, 0, 1, 1], [], []>} : vector<8x8xf32>, vector<8x8xf32>, vector<8x8xf32> -> vector<8x8xf32>
    %47 = arith.mulf %46, %23 : vector<8x8xf32>
    %cst_23 = arith.constant dense<0.000000e+00> : vector<8xf32>
    %48 = vector.multi_reduction <add>, %47, %cst_23 [0] : vector<8x8xf32> to vector<8xf32>
    %49 = vector.shape_cast %48 : vector<8xf32> to vector<1x8xf32>
    %50 = arith.addf %45, %49 : vector<1x8xf32>
    %cst_24 = arith.constant 0.000000e+00 : f32
    %51 = vector.broadcast %cst_24 : f32 to vector<1x8xf32>
    %52 = arith.select %25, %50, %51 : vector<1x8xi1>, vector<1x8xf32>
    %53 = arith.addf %12, %52 : vector<1x8xf32>
    %c2_i32 = arith.constant 2 : i32
    %54 = arith.index_cast %c2_i32 : i32 to index
    %c0_25 = arith.constant 0 : index
    %c0_26 = arith.constant 0 : index
    %55 = vector.load %arg2[%54, %c0_25, %c0_26] : memref<16x8x8xf32, #tpu.memory_space<vmem>>, vector<1x8x8xf32>
    %56 = vector.shape_cast %55 : vector<1x8x8xf32> to vector<8x8xf32>
    %57 = arith.index_cast %c2_i32 : i32 to index
    %c0_27 = arith.constant 0 : index
    %58 = vector.load %arg4[%57, %c0_27] : memref<16x8xf32, #tpu.memory_space<vmem>>, vector<1x8xf32>
    %59 = arith.index_cast %c2_i32 : i32 to index
    %c0_28 = arith.constant 0 : index
    %60 = vector.load %arg3[%59, %c0_28] : memref<16x8xi32, #tpu.memory_space<vmem>>, vector<1x8xi32>
    %61 = vector.broadcast %60 : vector<1x8xi32> to vector<8x8xi32>
    %62 = arith.cmpi eq, %3, %61 : vector<8x8xi32>
    %63 = arith.extui %62 : vector<8x8xi1> to vector<8x8xi32>
    %64 = arith.sitofp %63 : vector<8x8xi32> to vector<8x8xf32>
    %cst_29 = arith.constant 0.000000e+00 : f32
    %65 = vector.broadcast %cst_29 : f32 to vector<1x8xf32>
    %66 = arith.cmpf one, %58, %65 : vector<1x8xf32>
    %cst_30 = arith.constant dense<0xFF800000> : vector<8xf32>
    %67 = vector.multi_reduction <maximumf>, %42, %cst_30 [0] : vector<8x8xf32> to vector<8xf32>
    %68 = vector.shape_cast %67 : vector<8xf32> to vector<1x8xf32>
    %69 = vector.broadcast %68 : vector<1x8xf32> to vector<8x8xf32>
    %70 = arith.subf %42, %69 : vector<8x8xf32>
    %71 = math.exp %70 : vector<8x8xf32>
    %cst_31 = arith.constant dense<0.000000e+00> : vector<8x8xf32>
    %72 = tpu.matmul %0, %71, %cst_31 {dimension_numbers = #tpu.dot_dimension_numbers<[1], [0], [0], [1], [0, 0, 1, 1], [], []>} : vector<8x8xf32>, vector<8x8xf32>, vector<8x8xf32> -> vector<8x8xf32>
    %cst_32 = arith.constant 1.17549435E-38 : f32
    %73 = vector.broadcast %cst_32 : f32 to vector<8x8xf32>
    %74 = arith.maximumf %72, %73 : vector<8x8xf32>
    %75 = math.log %74 : vector<8x8xf32>
    %76 = vector.broadcast %68 : vector<1x8xf32> to vector<8x8xf32>
    %77 = arith.addf %75, %76 : vector<8x8xf32>
    %78 = vector.broadcast %1 : vector<8x1xf32> to vector<8x8xf32>
    %79 = arith.addf %77, %78 : vector<8x8xf32>
    %80 = arith.addf %79, %56 : vector<8x8xf32>
    %81 = vector.shape_cast %66 : vector<1x8xi1> to vector<1x8xi1>
    %82 = vector.broadcast %81 : vector<1x8xi1> to vector<8x8xi1>
    %83 = arith.select %82, %80, %42 : vector<8x8xi1>, vector<8x8xf32>
    %84 = arith.mulf %56, %64 : vector<8x8xf32>
    %cst_33 = arith.constant dense<0.000000e+00> : vector<8xf32>
    %85 = vector.multi_reduction <add>, %84, %cst_33 [0] : vector<8x8xf32> to vector<8xf32>
    %86 = vector.shape_cast %85 : vector<8xf32> to vector<1x8xf32>
    %cst_34 = arith.constant dense<0.000000e+00> : vector<8x8xf32>
    %87 = tpu.matmul %2, %23, %cst_34 {dimension_numbers = #tpu.dot_dimension_numbers<[1], [0], [0], [1], [0, 0, 1, 1], [], []>} : vector<8x8xf32>, vector<8x8xf32>, vector<8x8xf32> -> vector<8x8xf32>
    %88 = arith.mulf %87, %64 : vector<8x8xf32>
    %cst_35 = arith.constant dense<0.000000e+00> : vector<8xf32>
    %89 = vector.multi_reduction <add>, %88, %cst_35 [0] : vector<8x8xf32> to vector<8xf32>
    %90 = vector.shape_cast %89 : vector<8xf32> to vector<1x8xf32>
    %91 = arith.addf %86, %90 : vector<1x8xf32>
    %cst_36 = arith.constant 0.000000e+00 : f32
    %92 = vector.broadcast %cst_36 : f32 to vector<1x8xf32>
    %93 = arith.select %66, %91, %92 : vector<1x8xi1>, vector<1x8xf32>
    %94 = arith.addf %53, %93 : vector<1x8xf32>
    %c3_i32 = arith.constant 3 : i32
    %95 = arith.index_cast %c3_i32 : i32 to index
    %c0_37 = arith.constant 0 : index
    %c0_38 = arith.constant 0 : index
    %96 = vector.load %arg2[%95, %c0_37, %c0_38] : memref<16x8x8xf32, #tpu.memory_space<vmem>>, vector<1x8x8xf32>
    %97 = vector.shape_cast %96 : vector<1x8x8xf32> to vector<8x8xf32>
    %98 = arith.index_cast %c3_i32 : i32 to index
    %c0_39 = arith.constant 0 : index
    %99 = vector.load %arg4[%98, %c0_39] : memref<16x8xf32, #tpu.memory_space<vmem>>, vector<1x8xf32>
    %100 = arith.index_cast %c3_i32 : i32 to index
    %c0_40 = arith.constant 0 : index
    %101 = vector.load %arg3[%100, %c0_40] : memref<16x8xi32, #tpu.memory_space<vmem>>, vector<1x8xi32>
    %102 = vector.broadcast %101 : vector<1x8xi32> to vector<8x8xi32>
    %103 = arith.cmpi eq, %3, %102 : vector<8x8xi32>
    %104 = arith.extui %103 : vector<8x8xi1> to vector<8x8xi32>
    %105 = arith.sitofp %104 : vector<8x8xi32> to vector<8x8xf32>
    %cst_41 = arith.constant 0.000000e+00 : f32
    %106 = vector.broadcast %cst_41 : f32 to vector<1x8xf32>
    %107 = arith.cmpf one, %99, %106 : vector<1x8xf32>
    %cst_42 = arith.constant dense<0xFF800000> : vector<8xf32>
    %108 = vector.multi_reduction <maximumf>, %83, %cst_42 [0] : vector<8x8xf32> to vector<8xf32>
    %109 = vector.shape_cast %108 : vector<8xf32> to vector<1x8xf32>
    %110 = vector.broadcast %109 : vector<1x8xf32> to vector<8x8xf32>
    %111 = arith.subf %83, %110 : vector<8x8xf32>
    %112 = math.exp %111 : vector<8x8xf32>
    %cst_43 = arith.constant dense<0.000000e+00> : vector<8x8xf32>
    %113 = tpu.matmul %0, %112, %cst_43 {dimension_numbers = #tpu.dot_dimension_numbers<[1], [0], [0], [1], [0, 0, 1, 1], [], []>} : vector<8x8xf32>, vector<8x8xf32>, vector<8x8xf32> -> vector<8x8xf32>
    %cst_44 = arith.constant 1.17549435E-38 : f32
    %114 = vector.broadcast %cst_44 : f32 to vector<8x8xf32>
    %115 = arith.maximumf %113, %114 : vector<8x8xf32>
    %116 = math.log %115 : vector<8x8xf32>
    %117 = vector.broadcast %109 : vector<1x8xf32> to vector<8x8xf32>
    %118 = arith.addf %116, %117 : vector<8x8xf32>
    %119 = vector.broadcast %1 : vector<8x1xf32> to vector<8x8xf32>
    %120 = arith.addf %118, %119 : vector<8x8xf32>
    %121 = arith.addf %120, %97 : vector<8x8xf32>
    %122 = vector.shape_cast %107 : vector<1x8xi1> to vector<1x8xi1>
    %123 = vector.broadcast %122 : vector<1x8xi1> to vector<8x8xi1>
    %124 = arith.select %123, %121, %83 : vector<8x8xi1>, vector<8x8xf32>
    %125 = arith.mulf %97, %105 : vector<8x8xf32>
    %cst_45 = arith.constant dense<0.000000e+00> : vector<8xf32>
    %126 = vector.multi_reduction <add>, %125, %cst_45 [0] : vector<8x8xf32> to vector<8xf32>
    %127 = vector.shape_cast %126 : vector<8xf32> to vector<1x8xf32>
    %cst_46 = arith.constant dense<0.000000e+00> : vector<8x8xf32>
    %128 = tpu.matmul %2, %64, %cst_46 {dimension_numbers = #tpu.dot_dimension_numbers<[1], [0], [0], [1], [0, 0, 1, 1], [], []>} : vector<8x8xf32>, vector<8x8xf32>, vector<8x8xf32> -> vector<8x8xf32>
    %129 = arith.mulf %128, %105 : vector<8x8xf32>
    %cst_47 = arith.constant dense<0.000000e+00> : vector<8xf32>
    %130 = vector.multi_reduction <add>, %129, %cst_47 [0] : vector<8x8xf32> to vector<8xf32>
    %131 = vector.shape_cast %130 : vector<8xf32> to vector<1x8xf32>
    %132 = arith.addf %127, %131 : vector<1x8xf32>
    %cst_48 = arith.constant 0.000000e+00 : f32
    %133 = vector.broadcast %cst_48 : f32 to vector<1x8xf32>
    %134 = arith.select %107, %132, %133 : vector<1x8xi1>, vector<1x8xf32>
    %135 = arith.addf %94, %134 : vector<1x8xf32>
    %c4_i32 = arith.constant 4 : i32
    %136 = arith.index_cast %c4_i32 : i32 to index
    %c0_49 = arith.constant 0 : index
    %c0_50 = arith.constant 0 : index
    %137 = vector.load %arg2[%136, %c0_49, %c0_50] : memref<16x8x8xf32, #tpu.memory_space<vmem>>, vector<1x8x8xf32>
    %138 = vector.shape_cast %137 : vector<1x8x8xf32> to vector<8x8xf32>
    %139 = arith.index_cast %c4_i32 : i32 to index
    %c0_51 = arith.constant 0 : index
    %140 = vector.load %arg4[%139, %c0_51] : memref<16x8xf32, #tpu.memory_space<vmem>>, vector<1x8xf32>
    %141 = arith.index_cast %c4_i32 : i32 to index
    %c0_52 = arith.constant 0 : index
    %142 = vector.load %arg3[%141, %c0_52] : memref<16x8xi32, #tpu.memory_space<vmem>>, vector<1x8xi32>
    %143 = vector.broadcast %142 : vector<1x8xi32> to vector<8x8xi32>
    %144 = arith.cmpi eq, %3, %143 : vector<8x8xi32>
    %145 = arith.extui %144 : vector<8x8xi1> to vector<8x8xi32>
    %146 = arith.sitofp %145 : vector<8x8xi32> to vector<8x8xf32>
    %cst_53 = arith.constant 0.000000e+00 : f32
    %147 = vector.broadcast %cst_53 : f32 to vector<1x8xf32>
    %148 = arith.cmpf one, %140, %147 : vector<1x8xf32>
    %cst_54 = arith.constant dense<0xFF800000> : vector<8xf32>
    %149 = vector.multi_reduction <maximumf>, %124, %cst_54 [0] : vector<8x8xf32> to vector<8xf32>
    %150 = vector.shape_cast %149 : vector<8xf32> to vector<1x8xf32>
    %151 = vector.broadcast %150 : vector<1x8xf32> to vector<8x8xf32>
    %152 = arith.subf %124, %151 : vector<8x8xf32>
    %153 = math.exp %152 : vector<8x8xf32>
    %cst_55 = arith.constant dense<0.000000e+00> : vector<8x8xf32>
    %154 = tpu.matmul %0, %153, %cst_55 {dimension_numbers = #tpu.dot_dimension_numbers<[1], [0], [0], [1], [0, 0, 1, 1], [], []>} : vector<8x8xf32>, vector<8x8xf32>, vector<8x8xf32> -> vector<8x8xf32>
    %cst_56 = arith.constant 1.17549435E-38 : f32
    %155 = vector.broadcast %cst_56 : f32 to vector<8x8xf32>
    %156 = arith.maximumf %154, %155 : vector<8x8xf32>
    %157 = math.log %156 : vector<8x8xf32>
    %158 = vector.broadcast %150 : vector<1x8xf32> to vector<8x8xf32>
    %159 = arith.addf %157, %158 : vector<8x8xf32>
    %160 = vector.broadcast %1 : vector<8x1xf32> to vector<8x8xf32>
    %161 = arith.addf %159, %160 : vector<8x8xf32>
    %162 = arith.addf %161, %138 : vector<8x8xf32>
    %163 = vector.shape_cast %148 : vector<1x8xi1> to vector<1x8xi1>
    %164 = vector.broadcast %163 : vector<1x8xi1> to vector<8x8xi1>
    %165 = arith.select %164, %162, %124 : vector<8x8xi1>, vector<8x8xf32>
    %166 = arith.mulf %138, %146 : vector<8x8xf32>
    %cst_57 = arith.constant dense<0.000000e+00> : vector<8xf32>
    %167 = vector.multi_reduction <add>, %166, %cst_57 [0] : vector<8x8xf32> to vector<8xf32>
    %168 = vector.shape_cast %167 : vector<8xf32> to vector<1x8xf32>
    %cst_58 = arith.constant dense<0.000000e+00> : vector<8x8xf32>
    %169 = tpu.matmul %2, %105, %cst_58 {dimension_numbers = #tpu.dot_dimension_numbers<[1], [0], [0], [1], [0, 0, 1, 1], [], []>} : vector<8x8xf32>, vector<8x8xf32>, vector<8x8xf32> -> vector<8x8xf32>
    %170 = arith.mulf %169, %146 : vector<8x8xf32>
    %cst_59 = arith.constant dense<0.000000e+00> : vector<8xf32>
    %171 = vector.multi_reduction <add>, %170, %cst_59 [0] : vector<8x8xf32> to vector<8xf32>
    %172 = vector.shape_cast %171 : vector<8xf32> to vector<1x8xf32>
    %173 = arith.addf %168, %172 : vector<1x8xf32>
    %cst_60 = arith.constant 0.000000e+00 : f32
    %174 = vector.broadcast %cst_60 : f32 to vector<1x8xf32>
    %175 = arith.select %148, %173, %174 : vector<1x8xi1>, vector<1x8xf32>
    %176 = arith.addf %135, %175 : vector<1x8xf32>
    %c5_i32 = arith.constant 5 : i32
    %177 = arith.index_cast %c5_i32 : i32 to index
    %c0_61 = arith.constant 0 : index
    %c0_62 = arith.constant 0 : index
    %178 = vector.load %arg2[%177, %c0_61, %c0_62] : memref<16x8x8xf32, #tpu.memory_space<vmem>>, vector<1x8x8xf32>
    %179 = vector.shape_cast %178 : vector<1x8x8xf32> to vector<8x8xf32>
    %180 = arith.index_cast %c5_i32 : i32 to index
    %c0_63 = arith.constant 0 : index
    %181 = vector.load %arg4[%180, %c0_63] : memref<16x8xf32, #tpu.memory_space<vmem>>, vector<1x8xf32>
    %182 = arith.index_cast %c5_i32 : i32 to index
    %c0_64 = arith.constant 0 : index
    %183 = vector.load %arg3[%182, %c0_64] : memref<16x8xi32, #tpu.memory_space<vmem>>, vector<1x8xi32>
    %184 = vector.broadcast %183 : vector<1x8xi32> to vector<8x8xi32>
    %185 = arith.cmpi eq, %3, %184 : vector<8x8xi32>
    %186 = arith.extui %185 : vector<8x8xi1> to vector<8x8xi32>
    %187 = arith.sitofp %186 : vector<8x8xi32> to vector<8x8xf32>
    %cst_65 = arith.constant 0.000000e+00 : f32
    %188 = vector.broadcast %cst_65 : f32 to vector<1x8xf32>
    %189 = arith.cmpf one, %181, %188 : vector<1x8xf32>
    %cst_66 = arith.constant dense<0xFF800000> : vector<8xf32>
    %190 = vector.multi_reduction <maximumf>, %165, %cst_66 [0] : vector<8x8xf32> to vector<8xf32>
    %191 = vector.shape_cast %190 : vector<8xf32> to vector<1x8xf32>
    %192 = vector.broadcast %191 : vector<1x8xf32> to vector<8x8xf32>
    %193 = arith.subf %165, %192 : vector<8x8xf32>
    %194 = math.exp %193 : vector<8x8xf32>
    %cst_67 = arith.constant dense<0.000000e+00> : vector<8x8xf32>
    %195 = tpu.matmul %0, %194, %cst_67 {dimension_numbers = #tpu.dot_dimension_numbers<[1], [0], [0], [1], [0, 0, 1, 1], [], []>} : vector<8x8xf32>, vector<8x8xf32>, vector<8x8xf32> -> vector<8x8xf32>
    %cst_68 = arith.constant 1.17549435E-38 : f32
    %196 = vector.broadcast %cst_68 : f32 to vector<8x8xf32>
    %197 = arith.maximumf %195, %196 : vector<8x8xf32>
    %198 = math.log %197 : vector<8x8xf32>
    %199 = vector.broadcast %191 : vector<1x8xf32> to vector<8x8xf32>
    %200 = arith.addf %198, %199 : vector<8x8xf32>
    %201 = vector.broadcast %1 : vector<8x1xf32> to vector<8x8xf32>
    %202 = arith.addf %200, %201 : vector<8x8xf32>
    %203 = arith.addf %202, %179 : vector<8x8xf32>
    %204 = vector.shape_cast %189 : vector<1x8xi1> to vector<1x8xi1>
    %205 = vector.broadcast %204 : vector<1x8xi1> to vector<8x8xi1>
    %206 = arith.select %205, %203, %165 : vector<8x8xi1>, vector<8x8xf32>
    %207 = arith.mulf %179, %187 : vector<8x8xf32>
    %cst_69 = arith.constant dense<0.000000e+00> : vector<8xf32>
    %208 = vector.multi_reduction <add>, %207, %cst_69 [0] : vector<8x8xf32> to vector<8xf32>
    %209 = vector.shape_cast %208 : vector<8xf32> to vector<1x8xf32>
    %cst_70 = arith.constant dense<0.000000e+00> : vector<8x8xf32>
    %210 = tpu.matmul %2, %146, %cst_70 {dimension_numbers = #tpu.dot_dimension_numbers<[1], [0], [0], [1], [0, 0, 1, 1], [], []>} : vector<8x8xf32>, vector<8x8xf32>, vector<8x8xf32> -> vector<8x8xf32>
    %211 = arith.mulf %210, %187 : vector<8x8xf32>
    %cst_71 = arith.constant dense<0.000000e+00> : vector<8xf32>
    %212 = vector.multi_reduction <add>, %211, %cst_71 [0] : vector<8x8xf32> to vector<8xf32>
    %213 = vector.shape_cast %212 : vector<8xf32> to vector<1x8xf32>
    %214 = arith.addf %209, %213 : vector<1x8xf32>
    %cst_72 = arith.constant 0.000000e+00 : f32
    %215 = vector.broadcast %cst_72 : f32 to vector<1x8xf32>
    %216 = arith.select %189, %214, %215 : vector<1x8xi1>, vector<1x8xf32>
    %217 = arith.addf %176, %216 : vector<1x8xf32>
    %c6_i32 = arith.constant 6 : i32
    %218 = arith.index_cast %c6_i32 : i32 to index
    %c0_73 = arith.constant 0 : index
    %c0_74 = arith.constant 0 : index
    %219 = vector.load %arg2[%218, %c0_73, %c0_74] : memref<16x8x8xf32, #tpu.memory_space<vmem>>, vector<1x8x8xf32>
    %220 = vector.shape_cast %219 : vector<1x8x8xf32> to vector<8x8xf32>
    %221 = arith.index_cast %c6_i32 : i32 to index
    %c0_75 = arith.constant 0 : index
    %222 = vector.load %arg4[%221, %c0_75] : memref<16x8xf32, #tpu.memory_space<vmem>>, vector<1x8xf32>
    %223 = arith.index_cast %c6_i32 : i32 to index
    %c0_76 = arith.constant 0 : index
    %224 = vector.load %arg3[%223, %c0_76] : memref<16x8xi32, #tpu.memory_space<vmem>>, vector<1x8xi32>
    %225 = vector.broadcast %224 : vector<1x8xi32> to vector<8x8xi32>
    %226 = arith.cmpi eq, %3, %225 : vector<8x8xi32>
    %227 = arith.extui %226 : vector<8x8xi1> to vector<8x8xi32>
    %228 = arith.sitofp %227 : vector<8x8xi32> to vector<8x8xf32>
    %cst_77 = arith.constant 0.000000e+00 : f32
    %229 = vector.broadcast %cst_77 : f32 to vector<1x8xf32>
    %230 = arith.cmpf one, %222, %229 : vector<1x8xf32>
    %cst_78 = arith.constant dense<0xFF800000> : vector<8xf32>
    %231 = vector.multi_reduction <maximumf>, %206, %cst_78 [0] : vector<8x8xf32> to vector<8xf32>
    %232 = vector.shape_cast %231 : vector<8xf32> to vector<1x8xf32>
    %233 = vector.broadcast %232 : vector<1x8xf32> to vector<8x8xf32>
    %234 = arith.subf %206, %233 : vector<8x8xf32>
    %235 = math.exp %234 : vector<8x8xf32>
    %cst_79 = arith.constant dense<0.000000e+00> : vector<8x8xf32>
    %236 = tpu.matmul %0, %235, %cst_79 {dimension_numbers = #tpu.dot_dimension_numbers<[1], [0], [0], [1], [0, 0, 1, 1], [], []>} : vector<8x8xf32>, vector<8x8xf32>, vector<8x8xf32> -> vector<8x8xf32>
    %cst_80 = arith.constant 1.17549435E-38 : f32
    %237 = vector.broadcast %cst_80 : f32 to vector<8x8xf32>
    %238 = arith.maximumf %236, %237 : vector<8x8xf32>
    %239 = math.log %238 : vector<8x8xf32>
    %240 = vector.broadcast %232 : vector<1x8xf32> to vector<8x8xf32>
    %241 = arith.addf %239, %240 : vector<8x8xf32>
    %242 = vector.broadcast %1 : vector<8x1xf32> to vector<8x8xf32>
    %243 = arith.addf %241, %242 : vector<8x8xf32>
    %244 = arith.addf %243, %220 : vector<8x8xf32>
    %245 = vector.shape_cast %230 : vector<1x8xi1> to vector<1x8xi1>
    %246 = vector.broadcast %245 : vector<1x8xi1> to vector<8x8xi1>
    %247 = arith.select %246, %244, %206 : vector<8x8xi1>, vector<8x8xf32>
    %248 = arith.mulf %220, %228 : vector<8x8xf32>
    %cst_81 = arith.constant dense<0.000000e+00> : vector<8xf32>
    %249 = vector.multi_reduction <add>, %248, %cst_81 [0] : vector<8x8xf32> to vector<8xf32>
    %250 = vector.shape_cast %249 : vector<8xf32> to vector<1x8xf32>
    %cst_82 = arith.constant dense<0.000000e+00> : vector<8x8xf32>
    %251 = tpu.matmul %2, %187, %cst_82 {dimension_numbers = #tpu.dot_dimension_numbers<[1], [0], [0], [1], [0, 0, 1, 1], [], []>} : vector<8x8xf32>, vector<8x8xf32>, vector<8x8xf32> -> vector<8x8xf32>
    %252 = arith.mulf %251, %228 : vector<8x8xf32>
    %cst_83 = arith.constant dense<0.000000e+00> : vector<8xf32>
    %253 = vector.multi_reduction <add>, %252, %cst_83 [0] : vector<8x8xf32> to vector<8xf32>
    %254 = vector.shape_cast %253 : vector<8xf32> to vector<1x8xf32>
    %255 = arith.addf %250, %254 : vector<1x8xf32>
    %cst_84 = arith.constant 0.000000e+00 : f32
    %256 = vector.broadcast %cst_84 : f32 to vector<1x8xf32>
    %257 = arith.select %230, %255, %256 : vector<1x8xi1>, vector<1x8xf32>
    %258 = arith.addf %217, %257 : vector<1x8xf32>
    %c7_i32 = arith.constant 7 : i32
    %259 = arith.index_cast %c7_i32 : i32 to index
    %c0_85 = arith.constant 0 : index
    %c0_86 = arith.constant 0 : index
    %260 = vector.load %arg2[%259, %c0_85, %c0_86] : memref<16x8x8xf32, #tpu.memory_space<vmem>>, vector<1x8x8xf32>
    %261 = vector.shape_cast %260 : vector<1x8x8xf32> to vector<8x8xf32>
    %262 = arith.index_cast %c7_i32 : i32 to index
    %c0_87 = arith.constant 0 : index
    %263 = vector.load %arg4[%262, %c0_87] : memref<16x8xf32, #tpu.memory_space<vmem>>, vector<1x8xf32>
    %264 = arith.index_cast %c7_i32 : i32 to index
    %c0_88 = arith.constant 0 : index
    %265 = vector.load %arg3[%264, %c0_88] : memref<16x8xi32, #tpu.memory_space<vmem>>, vector<1x8xi32>
    %266 = vector.broadcast %265 : vector<1x8xi32> to vector<8x8xi32>
    %267 = arith.cmpi eq, %3, %266 : vector<8x8xi32>
    %268 = arith.extui %267 : vector<8x8xi1> to vector<8x8xi32>
    %269 = arith.sitofp %268 : vector<8x8xi32> to vector<8x8xf32>
    %cst_89 = arith.constant 0.000000e+00 : f32
    %270 = vector.broadcast %cst_89 : f32 to vector<1x8xf32>
    %271 = arith.cmpf one, %263, %270 : vector<1x8xf32>
    %cst_90 = arith.constant dense<0xFF800000> : vector<8xf32>
    %272 = vector.multi_reduction <maximumf>, %247, %cst_90 [0] : vector<8x8xf32> to vector<8xf32>
    %273 = vector.shape_cast %272 : vector<8xf32> to vector<1x8xf32>
    %274 = vector.broadcast %273 : vector<1x8xf32> to vector<8x8xf32>
    %275 = arith.subf %247, %274 : vector<8x8xf32>
    %276 = math.exp %275 : vector<8x8xf32>
    %cst_91 = arith.constant dense<0.000000e+00> : vector<8x8xf32>
    %277 = tpu.matmul %0, %276, %cst_91 {dimension_numbers = #tpu.dot_dimension_numbers<[1], [0], [0], [1], [0, 0, 1, 1], [], []>} : vector<8x8xf32>, vector<8x8xf32>, vector<8x8xf32> -> vector<8x8xf32>
    %cst_92 = arith.constant 1.17549435E-38 : f32
    %278 = vector.broadcast %cst_92 : f32 to vector<8x8xf32>
    %279 = arith.maximumf %277, %278 : vector<8x8xf32>
    %280 = math.log %279 : vector<8x8xf32>
    %281 = vector.broadcast %273 : vector<1x8xf32> to vector<8x8xf32>
    %282 = arith.addf %280, %281 : vector<8x8xf32>
    %283 = vector.broadcast %1 : vector<8x1xf32> to vector<8x8xf32>
    %284 = arith.addf %282, %283 : vector<8x8xf32>
    %285 = arith.addf %284, %261 : vector<8x8xf32>
    %286 = vector.shape_cast %271 : vector<1x8xi1> to vector<1x8xi1>
    %287 = vector.broadcast %286 : vector<1x8xi1> to vector<8x8xi1>
    %288 = arith.select %287, %285, %247 : vector<8x8xi1>, vector<8x8xf32>
    %289 = arith.mulf %261, %269 : vector<8x8xf32>
    %cst_93 = arith.constant dense<0.000000e+00> : vector<8xf32>
    %290 = vector.multi_reduction <add>, %289, %cst_93 [0] : vector<8x8xf32> to vector<8xf32>
    %291 = vector.shape_cast %290 : vector<8xf32> to vector<1x8xf32>
    %cst_94 = arith.constant dense<0.000000e+00> : vector<8x8xf32>
    %292 = tpu.matmul %2, %228, %cst_94 {dimension_numbers = #tpu.dot_dimension_numbers<[1], [0], [0], [1], [0, 0, 1, 1], [], []>} : vector<8x8xf32>, vector<8x8xf32>, vector<8x8xf32> -> vector<8x8xf32>
    %293 = arith.mulf %292, %269 : vector<8x8xf32>
    %cst_95 = arith.constant dense<0.000000e+00> : vector<8xf32>
    %294 = vector.multi_reduction <add>, %293, %cst_95 [0] : vector<8x8xf32> to vector<8xf32>
    %295 = vector.shape_cast %294 : vector<8xf32> to vector<1x8xf32>
    %296 = arith.addf %291, %295 : vector<1x8xf32>
    %cst_96 = arith.constant 0.000000e+00 : f32
    %297 = vector.broadcast %cst_96 : f32 to vector<1x8xf32>
    %298 = arith.select %271, %296, %297 : vector<1x8xi1>, vector<1x8xf32>
    %299 = arith.addf %258, %298 : vector<1x8xf32>
    %c8_i32 = arith.constant 8 : i32
    %300 = arith.index_cast %c8_i32 : i32 to index
    %c0_97 = arith.constant 0 : index
    %c0_98 = arith.constant 0 : index
    %301 = vector.load %arg2[%300, %c0_97, %c0_98] : memref<16x8x8xf32, #tpu.memory_space<vmem>>, vector<1x8x8xf32>
    %302 = vector.shape_cast %301 : vector<1x8x8xf32> to vector<8x8xf32>
    %303 = arith.index_cast %c8_i32 : i32 to index
    %c0_99 = arith.constant 0 : index
    %304 = vector.load %arg4[%303, %c0_99] : memref<16x8xf32, #tpu.memory_space<vmem>>, vector<1x8xf32>
    %305 = arith.index_cast %c8_i32 : i32 to index
    %c0_100 = arith.constant 0 : index
    %306 = vector.load %arg3[%305, %c0_100] : memref<16x8xi32, #tpu.memory_space<vmem>>, vector<1x8xi32>
    %307 = vector.broadcast %306 : vector<1x8xi32> to vector<8x8xi32>
    %308 = arith.cmpi eq, %3, %307 : vector<8x8xi32>
    %309 = arith.extui %308 : vector<8x8xi1> to vector<8x8xi32>
    %310 = arith.sitofp %309 : vector<8x8xi32> to vector<8x8xf32>
    %cst_101 = arith.constant 0.000000e+00 : f32
    %311 = vector.broadcast %cst_101 : f32 to vector<1x8xf32>
    %312 = arith.cmpf one, %304, %311 : vector<1x8xf32>
    %cst_102 = arith.constant dense<0xFF800000> : vector<8xf32>
    %313 = vector.multi_reduction <maximumf>, %288, %cst_102 [0] : vector<8x8xf32> to vector<8xf32>
    %314 = vector.shape_cast %313 : vector<8xf32> to vector<1x8xf32>
    %315 = vector.broadcast %314 : vector<1x8xf32> to vector<8x8xf32>
    %316 = arith.subf %288, %315 : vector<8x8xf32>
    %317 = math.exp %316 : vector<8x8xf32>
    %cst_103 = arith.constant dense<0.000000e+00> : vector<8x8xf32>
    %318 = tpu.matmul %0, %317, %cst_103 {dimension_numbers = #tpu.dot_dimension_numbers<[1], [0], [0], [1], [0, 0, 1, 1], [], []>} : vector<8x8xf32>, vector<8x8xf32>, vector<8x8xf32> -> vector<8x8xf32>
    %cst_104 = arith.constant 1.17549435E-38 : f32
    %319 = vector.broadcast %cst_104 : f32 to vector<8x8xf32>
    %320 = arith.maximumf %318, %319 : vector<8x8xf32>
    %321 = math.log %320 : vector<8x8xf32>
    %322 = vector.broadcast %314 : vector<1x8xf32> to vector<8x8xf32>
    %323 = arith.addf %321, %322 : vector<8x8xf32>
    %324 = vector.broadcast %1 : vector<8x1xf32> to vector<8x8xf32>
    %325 = arith.addf %323, %324 : vector<8x8xf32>
    %326 = arith.addf %325, %302 : vector<8x8xf32>
    %327 = vector.shape_cast %312 : vector<1x8xi1> to vector<1x8xi1>
    %328 = vector.broadcast %327 : vector<1x8xi1> to vector<8x8xi1>
    %329 = arith.select %328, %326, %288 : vector<8x8xi1>, vector<8x8xf32>
    %330 = arith.mulf %302, %310 : vector<8x8xf32>
    %cst_105 = arith.constant dense<0.000000e+00> : vector<8xf32>
    %331 = vector.multi_reduction <add>, %330, %cst_105 [0] : vector<8x8xf32> to vector<8xf32>
    %332 = vector.shape_cast %331 : vector<8xf32> to vector<1x8xf32>
    %cst_106 = arith.constant dense<0.000000e+00> : vector<8x8xf32>
    %333 = tpu.matmul %2, %269, %cst_106 {dimension_numbers = #tpu.dot_dimension_numbers<[1], [0], [0], [1], [0, 0, 1, 1], [], []>} : vector<8x8xf32>, vector<8x8xf32>, vector<8x8xf32> -> vector<8x8xf32>
    %334 = arith.mulf %333, %310 : vector<8x8xf32>
    %cst_107 = arith.constant dense<0.000000e+00> : vector<8xf32>
    %335 = vector.multi_reduction <add>, %334, %cst_107 [0] : vector<8x8xf32> to vector<8xf32>
    %336 = vector.shape_cast %335 : vector<8xf32> to vector<1x8xf32>
    %337 = arith.addf %332, %336 : vector<1x8xf32>
    %cst_108 = arith.constant 0.000000e+00 : f32
    %338 = vector.broadcast %cst_108 : f32 to vector<1x8xf32>
    %339 = arith.select %312, %337, %338 : vector<1x8xi1>, vector<1x8xf32>
    %340 = arith.addf %299, %339 : vector<1x8xf32>
    %c9_i32 = arith.constant 9 : i32
    %341 = arith.index_cast %c9_i32 : i32 to index
    %c0_109 = arith.constant 0 : index
    %c0_110 = arith.constant 0 : index
    %342 = vector.load %arg2[%341, %c0_109, %c0_110] : memref<16x8x8xf32, #tpu.memory_space<vmem>>, vector<1x8x8xf32>
    %343 = vector.shape_cast %342 : vector<1x8x8xf32> to vector<8x8xf32>
    %344 = arith.index_cast %c9_i32 : i32 to index
    %c0_111 = arith.constant 0 : index
    %345 = vector.load %arg4[%344, %c0_111] : memref<16x8xf32, #tpu.memory_space<vmem>>, vector<1x8xf32>
    %346 = arith.index_cast %c9_i32 : i32 to index
    %c0_112 = arith.constant 0 : index
    %347 = vector.load %arg3[%346, %c0_112] : memref<16x8xi32, #tpu.memory_space<vmem>>, vector<1x8xi32>
    %348 = vector.broadcast %347 : vector<1x8xi32> to vector<8x8xi32>
    %349 = arith.cmpi eq, %3, %348 : vector<8x8xi32>
    %350 = arith.extui %349 : vector<8x8xi1> to vector<8x8xi32>
    %351 = arith.sitofp %350 : vector<8x8xi32> to vector<8x8xf32>
    %cst_113 = arith.constant 0.000000e+00 : f32
    %352 = vector.broadcast %cst_113 : f32 to vector<1x8xf32>
    %353 = arith.cmpf one, %345, %352 : vector<1x8xf32>
    %cst_114 = arith.constant dense<0xFF800000> : vector<8xf32>
    %354 = vector.multi_reduction <maximumf>, %329, %cst_114 [0] : vector<8x8xf32> to vector<8xf32>
    %355 = vector.shape_cast %354 : vector<8xf32> to vector<1x8xf32>
    %356 = vector.broadcast %355 : vector<1x8xf32> to vector<8x8xf32>
    %357 = arith.subf %329, %356 : vector<8x8xf32>
    %358 = math.exp %357 : vector<8x8xf32>
    %cst_115 = arith.constant dense<0.000000e+00> : vector<8x8xf32>
    %359 = tpu.matmul %0, %358, %cst_115 {dimension_numbers = #tpu.dot_dimension_numbers<[1], [0], [0], [1], [0, 0, 1, 1], [], []>} : vector<8x8xf32>, vector<8x8xf32>, vector<8x8xf32> -> vector<8x8xf32>
    %cst_116 = arith.constant 1.17549435E-38 : f32
    %360 = vector.broadcast %cst_116 : f32 to vector<8x8xf32>
    %361 = arith.maximumf %359, %360 : vector<8x8xf32>
    %362 = math.log %361 : vector<8x8xf32>
    %363 = vector.broadcast %355 : vector<1x8xf32> to vector<8x8xf32>
    %364 = arith.addf %362, %363 : vector<8x8xf32>
    %365 = vector.broadcast %1 : vector<8x1xf32> to vector<8x8xf32>
    %366 = arith.addf %364, %365 : vector<8x8xf32>
    %367 = arith.addf %366, %343 : vector<8x8xf32>
    %368 = vector.shape_cast %353 : vector<1x8xi1> to vector<1x8xi1>
    %369 = vector.broadcast %368 : vector<1x8xi1> to vector<8x8xi1>
    %370 = arith.select %369, %367, %329 : vector<8x8xi1>, vector<8x8xf32>
    %371 = arith.mulf %343, %351 : vector<8x8xf32>
    %cst_117 = arith.constant dense<0.000000e+00> : vector<8xf32>
    %372 = vector.multi_reduction <add>, %371, %cst_117 [0] : vector<8x8xf32> to vector<8xf32>
    %373 = vector.shape_cast %372 : vector<8xf32> to vector<1x8xf32>
    %cst_118 = arith.constant dense<0.000000e+00> : vector<8x8xf32>
    %374 = tpu.matmul %2, %310, %cst_118 {dimension_numbers = #tpu.dot_dimension_numbers<[1], [0], [0], [1], [0, 0, 1, 1], [], []>} : vector<8x8xf32>, vector<8x8xf32>, vector<8x8xf32> -> vector<8x8xf32>
    %375 = arith.mulf %374, %351 : vector<8x8xf32>
    %cst_119 = arith.constant dense<0.000000e+00> : vector<8xf32>
    %376 = vector.multi_reduction <add>, %375, %cst_119 [0] : vector<8x8xf32> to vector<8xf32>
    %377 = vector.shape_cast %376 : vector<8xf32> to vector<1x8xf32>
    %378 = arith.addf %373, %377 : vector<1x8xf32>
    %cst_120 = arith.constant 0.000000e+00 : f32
    %379 = vector.broadcast %cst_120 : f32 to vector<1x8xf32>
    %380 = arith.select %353, %378, %379 : vector<1x8xi1>, vector<1x8xf32>
    %381 = arith.addf %340, %380 : vector<1x8xf32>
    %c10_i32 = arith.constant 10 : i32
    %382 = arith.index_cast %c10_i32 : i32 to index
    %c0_121 = arith.constant 0 : index
    %c0_122 = arith.constant 0 : index
    %383 = vector.load %arg2[%382, %c0_121, %c0_122] : memref<16x8x8xf32, #tpu.memory_space<vmem>>, vector<1x8x8xf32>
    %384 = vector.shape_cast %383 : vector<1x8x8xf32> to vector<8x8xf32>
    %385 = arith.index_cast %c10_i32 : i32 to index
    %c0_123 = arith.constant 0 : index
    %386 = vector.load %arg4[%385, %c0_123] : memref<16x8xf32, #tpu.memory_space<vmem>>, vector<1x8xf32>
    %387 = arith.index_cast %c10_i32 : i32 to index
    %c0_124 = arith.constant 0 : index
    %388 = vector.load %arg3[%387, %c0_124] : memref<16x8xi32, #tpu.memory_space<vmem>>, vector<1x8xi32>
    %389 = vector.broadcast %388 : vector<1x8xi32> to vector<8x8xi32>
    %390 = arith.cmpi eq, %3, %389 : vector<8x8xi32>
    %391 = arith.extui %390 : vector<8x8xi1> to vector<8x8xi32>
    %392 = arith.sitofp %391 : vector<8x8xi32> to vector<8x8xf32>
    %cst_125 = arith.constant 0.000000e+00 : f32
    %393 = vector.broadcast %cst_125 : f32 to vector<1x8xf32>
    %394 = arith.cmpf one, %386, %393 : vector<1x8xf32>
    %cst_126 = arith.constant dense<0xFF800000> : vector<8xf32>
    %395 = vector.multi_reduction <maximumf>, %370, %cst_126 [0] : vector<8x8xf32> to vector<8xf32>
    %396 = vector.shape_cast %395 : vector<8xf32> to vector<1x8xf32>
    %397 = vector.broadcast %396 : vector<1x8xf32> to vector<8x8xf32>
    %398 = arith.subf %370, %397 : vector<8x8xf32>
    %399 = math.exp %398 : vector<8x8xf32>
    %cst_127 = arith.constant dense<0.000000e+00> : vector<8x8xf32>
    %400 = tpu.matmul %0, %399, %cst_127 {dimension_numbers = #tpu.dot_dimension_numbers<[1], [0], [0], [1], [0, 0, 1, 1], [], []>} : vector<8x8xf32>, vector<8x8xf32>, vector<8x8xf32> -> vector<8x8xf32>
    %cst_128 = arith.constant 1.17549435E-38 : f32
    %401 = vector.broadcast %cst_128 : f32 to vector<8x8xf32>
    %402 = arith.maximumf %400, %401 : vector<8x8xf32>
    %403 = math.log %402 : vector<8x8xf32>
    %404 = vector.broadcast %396 : vector<1x8xf32> to vector<8x8xf32>
    %405 = arith.addf %403, %404 : vector<8x8xf32>
    %406 = vector.broadcast %1 : vector<8x1xf32> to vector<8x8xf32>
    %407 = arith.addf %405, %406 : vector<8x8xf32>
    %408 = arith.addf %407, %384 : vector<8x8xf32>
    %409 = vector.shape_cast %394 : vector<1x8xi1> to vector<1x8xi1>
    %410 = vector.broadcast %409 : vector<1x8xi1> to vector<8x8xi1>
    %411 = arith.select %410, %408, %370 : vector<8x8xi1>, vector<8x8xf32>
    %412 = arith.mulf %384, %392 : vector<8x8xf32>
    %cst_129 = arith.constant dense<0.000000e+00> : vector<8xf32>
    %413 = vector.multi_reduction <add>, %412, %cst_129 [0] : vector<8x8xf32> to vector<8xf32>
    %414 = vector.shape_cast %413 : vector<8xf32> to vector<1x8xf32>
    %cst_130 = arith.constant dense<0.000000e+00> : vector<8x8xf32>
    %415 = tpu.matmul %2, %351, %cst_130 {dimension_numbers = #tpu.dot_dimension_numbers<[1], [0], [0], [1], [0, 0, 1, 1], [], []>} : vector<8x8xf32>, vector<8x8xf32>, vector<8x8xf32> -> vector<8x8xf32>
    %416 = arith.mulf %415, %392 : vector<8x8xf32>
    %cst_131 = arith.constant dense<0.000000e+00> : vector<8xf32>
    %417 = vector.multi_reduction <add>, %416, %cst_131 [0] : vector<8x8xf32> to vector<8xf32>
    %418 = vector.shape_cast %417 : vector<8xf32> to vector<1x8xf32>
    %419 = arith.addf %414, %418 : vector<1x8xf32>
    %cst_132 = arith.constant 0.000000e+00 : f32
    %420 = vector.broadcast %cst_132 : f32 to vector<1x8xf32>
    %421 = arith.select %394, %419, %420 : vector<1x8xi1>, vector<1x8xf32>
    %422 = arith.addf %381, %421 : vector<1x8xf32>
    %c11_i32 = arith.constant 11 : i32
    %423 = arith.index_cast %c11_i32 : i32 to index
    %c0_133 = arith.constant 0 : index
    %c0_134 = arith.constant 0 : index
    %424 = vector.load %arg2[%423, %c0_133, %c0_134] : memref<16x8x8xf32, #tpu.memory_space<vmem>>, vector<1x8x8xf32>
    %425 = vector.shape_cast %424 : vector<1x8x8xf32> to vector<8x8xf32>
    %426 = arith.index_cast %c11_i32 : i32 to index
    %c0_135 = arith.constant 0 : index
    %427 = vector.load %arg4[%426, %c0_135] : memref<16x8xf32, #tpu.memory_space<vmem>>, vector<1x8xf32>
    %428 = arith.index_cast %c11_i32 : i32 to index
    %c0_136 = arith.constant 0 : index
    %429 = vector.load %arg3[%428, %c0_136] : memref<16x8xi32, #tpu.memory_space<vmem>>, vector<1x8xi32>
    %430 = vector.broadcast %429 : vector<1x8xi32> to vector<8x8xi32>
    %431 = arith.cmpi eq, %3, %430 : vector<8x8xi32>
    %432 = arith.extui %431 : vector<8x8xi1> to vector<8x8xi32>
    %433 = arith.sitofp %432 : vector<8x8xi32> to vector<8x8xf32>
    %cst_137 = arith.constant 0.000000e+00 : f32
    %434 = vector.broadcast %cst_137 : f32 to vector<1x8xf32>
    %435 = arith.cmpf one, %427, %434 : vector<1x8xf32>
    %cst_138 = arith.constant dense<0xFF800000> : vector<8xf32>
    %436 = vector.multi_reduction <maximumf>, %411, %cst_138 [0] : vector<8x8xf32> to vector<8xf32>
    %437 = vector.shape_cast %436 : vector<8xf32> to vector<1x8xf32>
    %438 = vector.broadcast %437 : vector<1x8xf32> to vector<8x8xf32>
    %439 = arith.subf %411, %438 : vector<8x8xf32>
    %440 = math.exp %439 : vector<8x8xf32>
    %cst_139 = arith.constant dense<0.000000e+00> : vector<8x8xf32>
    %441 = tpu.matmul %0, %440, %cst_139 {dimension_numbers = #tpu.dot_dimension_numbers<[1], [0], [0], [1], [0, 0, 1, 1], [], []>} : vector<8x8xf32>, vector<8x8xf32>, vector<8x8xf32> -> vector<8x8xf32>
    %cst_140 = arith.constant 1.17549435E-38 : f32
    %442 = vector.broadcast %cst_140 : f32 to vector<8x8xf32>
    %443 = arith.maximumf %441, %442 : vector<8x8xf32>
    %444 = math.log %443 : vector<8x8xf32>
    %445 = vector.broadcast %437 : vector<1x8xf32> to vector<8x8xf32>
    %446 = arith.addf %444, %445 : vector<8x8xf32>
    %447 = vector.broadcast %1 : vector<8x1xf32> to vector<8x8xf32>
    %448 = arith.addf %446, %447 : vector<8x8xf32>
    %449 = arith.addf %448, %425 : vector<8x8xf32>
    %450 = vector.shape_cast %435 : vector<1x8xi1> to vector<1x8xi1>
    %451 = vector.broadcast %450 : vector<1x8xi1> to vector<8x8xi1>
    %452 = arith.select %451, %449, %411 : vector<8x8xi1>, vector<8x8xf32>
    %453 = arith.mulf %425, %433 : vector<8x8xf32>
    %cst_141 = arith.constant dense<0.000000e+00> : vector<8xf32>
    %454 = vector.multi_reduction <add>, %453, %cst_141 [0] : vector<8x8xf32> to vector<8xf32>
    %455 = vector.shape_cast %454 : vector<8xf32> to vector<1x8xf32>
    %cst_142 = arith.constant dense<0.000000e+00> : vector<8x8xf32>
    %456 = tpu.matmul %2, %392, %cst_142 {dimension_numbers = #tpu.dot_dimension_numbers<[1], [0], [0], [1], [0, 0, 1, 1], [], []>} : vector<8x8xf32>, vector<8x8xf32>, vector<8x8xf32> -> vector<8x8xf32>
    %457 = arith.mulf %456, %433 : vector<8x8xf32>
    %cst_143 = arith.constant dense<0.000000e+00> : vector<8xf32>
    %458 = vector.multi_reduction <add>, %457, %cst_143 [0] : vector<8x8xf32> to vector<8xf32>
    %459 = vector.shape_cast %458 : vector<8xf32> to vector<1x8xf32>
    %460 = arith.addf %455, %459 : vector<1x8xf32>
    %cst_144 = arith.constant 0.000000e+00 : f32
    %461 = vector.broadcast %cst_144 : f32 to vector<1x8xf32>
    %462 = arith.select %435, %460, %461 : vector<1x8xi1>, vector<1x8xf32>
    %463 = arith.addf %422, %462 : vector<1x8xf32>
    %c12_i32 = arith.constant 12 : i32
    %464 = arith.index_cast %c12_i32 : i32 to index
    %c0_145 = arith.constant 0 : index
    %c0_146 = arith.constant 0 : index
    %465 = vector.load %arg2[%464, %c0_145, %c0_146] : memref<16x8x8xf32, #tpu.memory_space<vmem>>, vector<1x8x8xf32>
    %466 = vector.shape_cast %465 : vector<1x8x8xf32> to vector<8x8xf32>
    %467 = arith.index_cast %c12_i32 : i32 to index
    %c0_147 = arith.constant 0 : index
    %468 = vector.load %arg4[%467, %c0_147] : memref<16x8xf32, #tpu.memory_space<vmem>>, vector<1x8xf32>
    %469 = arith.index_cast %c12_i32 : i32 to index
    %c0_148 = arith.constant 0 : index
    %470 = vector.load %arg3[%469, %c0_148] : memref<16x8xi32, #tpu.memory_space<vmem>>, vector<1x8xi32>
    %471 = vector.broadcast %470 : vector<1x8xi32> to vector<8x8xi32>
    %472 = arith.cmpi eq, %3, %471 : vector<8x8xi32>
    %473 = arith.extui %472 : vector<8x8xi1> to vector<8x8xi32>
    %474 = arith.sitofp %473 : vector<8x8xi32> to vector<8x8xf32>
    %cst_149 = arith.constant 0.000000e+00 : f32
    %475 = vector.broadcast %cst_149 : f32 to vector<1x8xf32>
    %476 = arith.cmpf one, %468, %475 : vector<1x8xf32>
    %cst_150 = arith.constant dense<0xFF800000> : vector<8xf32>
    %477 = vector.multi_reduction <maximumf>, %452, %cst_150 [0] : vector<8x8xf32> to vector<8xf32>
    %478 = vector.shape_cast %477 : vector<8xf32> to vector<1x8xf32>
    %479 = vector.broadcast %478 : vector<1x8xf32> to vector<8x8xf32>
    %480 = arith.subf %452, %479 : vector<8x8xf32>
    %481 = math.exp %480 : vector<8x8xf32>
    %cst_151 = arith.constant dense<0.000000e+00> : vector<8x8xf32>
    %482 = tpu.matmul %0, %481, %cst_151 {dimension_numbers = #tpu.dot_dimension_numbers<[1], [0], [0], [1], [0, 0, 1, 1], [], []>} : vector<8x8xf32>, vector<8x8xf32>, vector<8x8xf32> -> vector<8x8xf32>
    %cst_152 = arith.constant 1.17549435E-38 : f32
    %483 = vector.broadcast %cst_152 : f32 to vector<8x8xf32>
    %484 = arith.maximumf %482, %483 : vector<8x8xf32>
    %485 = math.log %484 : vector<8x8xf32>
    %486 = vector.broadcast %478 : vector<1x8xf32> to vector<8x8xf32>
    %487 = arith.addf %485, %486 : vector<8x8xf32>
    %488 = vector.broadcast %1 : vector<8x1xf32> to vector<8x8xf32>
    %489 = arith.addf %487, %488 : vector<8x8xf32>
    %490 = arith.addf %489, %466 : vector<8x8xf32>
    %491 = vector.shape_cast %476 : vector<1x8xi1> to vector<1x8xi1>
    %492 = vector.broadcast %491 : vector<1x8xi1> to vector<8x8xi1>
    %493 = arith.select %492, %490, %452 : vector<8x8xi1>, vector<8x8xf32>
    %494 = arith.mulf %466, %474 : vector<8x8xf32>
    %cst_153 = arith.constant dense<0.000000e+00> : vector<8xf32>
    %495 = vector.multi_reduction <add>, %494, %cst_153 [0] : vector<8x8xf32> to vector<8xf32>
    %496 = vector.shape_cast %495 : vector<8xf32> to vector<1x8xf32>
    %cst_154 = arith.constant dense<0.000000e+00> : vector<8x8xf32>
    %497 = tpu.matmul %2, %433, %cst_154 {dimension_numbers = #tpu.dot_dimension_numbers<[1], [0], [0], [1], [0, 0, 1, 1], [], []>} : vector<8x8xf32>, vector<8x8xf32>, vector<8x8xf32> -> vector<8x8xf32>
    %498 = arith.mulf %497, %474 : vector<8x8xf32>
    %cst_155 = arith.constant dense<0.000000e+00> : vector<8xf32>
    %499 = vector.multi_reduction <add>, %498, %cst_155 [0] : vector<8x8xf32> to vector<8xf32>
    %500 = vector.shape_cast %499 : vector<8xf32> to vector<1x8xf32>
    %501 = arith.addf %496, %500 : vector<1x8xf32>
    %cst_156 = arith.constant 0.000000e+00 : f32
    %502 = vector.broadcast %cst_156 : f32 to vector<1x8xf32>
    %503 = arith.select %476, %501, %502 : vector<1x8xi1>, vector<1x8xf32>
    %504 = arith.addf %463, %503 : vector<1x8xf32>
    %c13_i32 = arith.constant 13 : i32
    %505 = arith.index_cast %c13_i32 : i32 to index
    %c0_157 = arith.constant 0 : index
    %c0_158 = arith.constant 0 : index
    %506 = vector.load %arg2[%505, %c0_157, %c0_158] : memref<16x8x8xf32, #tpu.memory_space<vmem>>, vector<1x8x8xf32>
    %507 = vector.shape_cast %506 : vector<1x8x8xf32> to vector<8x8xf32>
    %508 = arith.index_cast %c13_i32 : i32 to index
    %c0_159 = arith.constant 0 : index
    %509 = vector.load %arg4[%508, %c0_159] : memref<16x8xf32, #tpu.memory_space<vmem>>, vector<1x8xf32>
    %510 = arith.index_cast %c13_i32 : i32 to index
    %c0_160 = arith.constant 0 : index
    %511 = vector.load %arg3[%510, %c0_160] : memref<16x8xi32, #tpu.memory_space<vmem>>, vector<1x8xi32>
    %512 = vector.broadcast %511 : vector<1x8xi32> to vector<8x8xi32>
    %513 = arith.cmpi eq, %3, %512 : vector<8x8xi32>
    %514 = arith.extui %513 : vector<8x8xi1> to vector<8x8xi32>
    %515 = arith.sitofp %514 : vector<8x8xi32> to vector<8x8xf32>
    %cst_161 = arith.constant 0.000000e+00 : f32
    %516 = vector.broadcast %cst_161 : f32 to vector<1x8xf32>
    %517 = arith.cmpf one, %509, %516 : vector<1x8xf32>
    %cst_162 = arith.constant dense<0xFF800000> : vector<8xf32>
    %518 = vector.multi_reduction <maximumf>, %493, %cst_162 [0] : vector<8x8xf32> to vector<8xf32>
    %519 = vector.shape_cast %518 : vector<8xf32> to vector<1x8xf32>
    %520 = vector.broadcast %519 : vector<1x8xf32> to vector<8x8xf32>
    %521 = arith.subf %493, %520 : vector<8x8xf32>
    %522 = math.exp %521 : vector<8x8xf32>
    %cst_163 = arith.constant dense<0.000000e+00> : vector<8x8xf32>
    %523 = tpu.matmul %0, %522, %cst_163 {dimension_numbers = #tpu.dot_dimension_numbers<[1], [0], [0], [1], [0, 0, 1, 1], [], []>} : vector<8x8xf32>, vector<8x8xf32>, vector<8x8xf32> -> vector<8x8xf32>
    %cst_164 = arith.constant 1.17549435E-38 : f32
    %524 = vector.broadcast %cst_164 : f32 to vector<8x8xf32>
    %525 = arith.maximumf %523, %524 : vector<8x8xf32>
    %526 = math.log %525 : vector<8x8xf32>
    %527 = vector.broadcast %519 : vector<1x8xf32> to vector<8x8xf32>
    %528 = arith.addf %526, %527 : vector<8x8xf32>
    %529 = vector.broadcast %1 : vector<8x1xf32> to vector<8x8xf32>
    %530 = arith.addf %528, %529 : vector<8x8xf32>
    %531 = arith.addf %530, %507 : vector<8x8xf32>
    %532 = vector.shape_cast %517 : vector<1x8xi1> to vector<1x8xi1>
    %533 = vector.broadcast %532 : vector<1x8xi1> to vector<8x8xi1>
    %534 = arith.select %533, %531, %493 : vector<8x8xi1>, vector<8x8xf32>
    %535 = arith.mulf %507, %515 : vector<8x8xf32>
    %cst_165 = arith.constant dense<0.000000e+00> : vector<8xf32>
    %536 = vector.multi_reduction <add>, %535, %cst_165 [0] : vector<8x8xf32> to vector<8xf32>
    %537 = vector.shape_cast %536 : vector<8xf32> to vector<1x8xf32>
    %cst_166 = arith.constant dense<0.000000e+00> : vector<8x8xf32>
    %538 = tpu.matmul %2, %474, %cst_166 {dimension_numbers = #tpu.dot_dimension_numbers<[1], [0], [0], [1], [0, 0, 1, 1], [], []>} : vector<8x8xf32>, vector<8x8xf32>, vector<8x8xf32> -> vector<8x8xf32>
    %539 = arith.mulf %538, %515 : vector<8x8xf32>
    %cst_167 = arith.constant dense<0.000000e+00> : vector<8xf32>
    %540 = vector.multi_reduction <add>, %539, %cst_167 [0] : vector<8x8xf32> to vector<8xf32>
    %541 = vector.shape_cast %540 : vector<8xf32> to vector<1x8xf32>
    %542 = arith.addf %537, %541 : vector<1x8xf32>
    %cst_168 = arith.constant 0.000000e+00 : f32
    %543 = vector.broadcast %cst_168 : f32 to vector<1x8xf32>
    %544 = arith.select %517, %542, %543 : vector<1x8xi1>, vector<1x8xf32>
    %545 = arith.addf %504, %544 : vector<1x8xf32>
    %c14_i32 = arith.constant 14 : i32
    %546 = arith.index_cast %c14_i32 : i32 to index
    %c0_169 = arith.constant 0 : index
    %c0_170 = arith.constant 0 : index
    %547 = vector.load %arg2[%546, %c0_169, %c0_170] : memref<16x8x8xf32, #tpu.memory_space<vmem>>, vector<1x8x8xf32>
    %548 = vector.shape_cast %547 : vector<1x8x8xf32> to vector<8x8xf32>
    %549 = arith.index_cast %c14_i32 : i32 to index
    %c0_171 = arith.constant 0 : index
    %550 = vector.load %arg4[%549, %c0_171] : memref<16x8xf32, #tpu.memory_space<vmem>>, vector<1x8xf32>
    %551 = arith.index_cast %c14_i32 : i32 to index
    %c0_172 = arith.constant 0 : index
    %552 = vector.load %arg3[%551, %c0_172] : memref<16x8xi32, #tpu.memory_space<vmem>>, vector<1x8xi32>
    %553 = vector.broadcast %552 : vector<1x8xi32> to vector<8x8xi32>
    %554 = arith.cmpi eq, %3, %553 : vector<8x8xi32>
    %555 = arith.extui %554 : vector<8x8xi1> to vector<8x8xi32>
    %556 = arith.sitofp %555 : vector<8x8xi32> to vector<8x8xf32>
    %cst_173 = arith.constant 0.000000e+00 : f32
    %557 = vector.broadcast %cst_173 : f32 to vector<1x8xf32>
    %558 = arith.cmpf one, %550, %557 : vector<1x8xf32>
    %cst_174 = arith.constant dense<0xFF800000> : vector<8xf32>
    %559 = vector.multi_reduction <maximumf>, %534, %cst_174 [0] : vector<8x8xf32> to vector<8xf32>
    %560 = vector.shape_cast %559 : vector<8xf32> to vector<1x8xf32>
    %561 = vector.broadcast %560 : vector<1x8xf32> to vector<8x8xf32>
    %562 = arith.subf %534, %561 : vector<8x8xf32>
    %563 = math.exp %562 : vector<8x8xf32>
    %cst_175 = arith.constant dense<0.000000e+00> : vector<8x8xf32>
    %564 = tpu.matmul %0, %563, %cst_175 {dimension_numbers = #tpu.dot_dimension_numbers<[1], [0], [0], [1], [0, 0, 1, 1], [], []>} : vector<8x8xf32>, vector<8x8xf32>, vector<8x8xf32> -> vector<8x8xf32>
    %cst_176 = arith.constant 1.17549435E-38 : f32
    %565 = vector.broadcast %cst_176 : f32 to vector<8x8xf32>
    %566 = arith.maximumf %564, %565 : vector<8x8xf32>
    %567 = math.log %566 : vector<8x8xf32>
    %568 = vector.broadcast %560 : vector<1x8xf32> to vector<8x8xf32>
    %569 = arith.addf %567, %568 : vector<8x8xf32>
    %570 = vector.broadcast %1 : vector<8x1xf32> to vector<8x8xf32>
    %571 = arith.addf %569, %570 : vector<8x8xf32>
    %572 = arith.addf %571, %548 : vector<8x8xf32>
    %573 = vector.shape_cast %558 : vector<1x8xi1> to vector<1x8xi1>
    %574 = vector.broadcast %573 : vector<1x8xi1> to vector<8x8xi1>
    %575 = arith.select %574, %572, %534 : vector<8x8xi1>, vector<8x8xf32>
    %576 = arith.mulf %548, %556 : vector<8x8xf32>
    %cst_177 = arith.constant dense<0.000000e+00> : vector<8xf32>
    %577 = vector.multi_reduction <add>, %576, %cst_177 [0] : vector<8x8xf32> to vector<8xf32>
    %578 = vector.shape_cast %577 : vector<8xf32> to vector<1x8xf32>
    %cst_178 = arith.constant dense<0.000000e+00> : vector<8x8xf32>
    %579 = tpu.matmul %2, %515, %cst_178 {dimension_numbers = #tpu.dot_dimension_numbers<[1], [0], [0], [1], [0, 0, 1, 1], [], []>} : vector<8x8xf32>, vector<8x8xf32>, vector<8x8xf32> -> vector<8x8xf32>
    %580 = arith.mulf %579, %556 : vector<8x8xf32>
    %cst_179 = arith.constant dense<0.000000e+00> : vector<8xf32>
    %581 = vector.multi_reduction <add>, %580, %cst_179 [0] : vector<8x8xf32> to vector<8xf32>
    %582 = vector.shape_cast %581 : vector<8xf32> to vector<1x8xf32>
    %583 = arith.addf %578, %582 : vector<1x8xf32>
    %cst_180 = arith.constant 0.000000e+00 : f32
    %584 = vector.broadcast %cst_180 : f32 to vector<1x8xf32>
    %585 = arith.select %558, %583, %584 : vector<1x8xi1>, vector<1x8xf32>
    %586 = arith.addf %545, %585 : vector<1x8xf32>
    %c15_i32 = arith.constant 15 : i32
    %587 = arith.index_cast %c15_i32 : i32 to index
    %c0_181 = arith.constant 0 : index
    %c0_182 = arith.constant 0 : index
    %588 = vector.load %arg2[%587, %c0_181, %c0_182] : memref<16x8x8xf32, #tpu.memory_space<vmem>>, vector<1x8x8xf32>
    %589 = vector.shape_cast %588 : vector<1x8x8xf32> to vector<8x8xf32>
    %590 = arith.index_cast %c15_i32 : i32 to index
    %c0_183 = arith.constant 0 : index
    %591 = vector.load %arg4[%590, %c0_183] : memref<16x8xf32, #tpu.memory_space<vmem>>, vector<1x8xf32>
    %592 = arith.index_cast %c15_i32 : i32 to index
    %c0_184 = arith.constant 0 : index
    %593 = vector.load %arg3[%592, %c0_184] : memref<16x8xi32, #tpu.memory_space<vmem>>, vector<1x8xi32>
    %594 = vector.broadcast %593 : vector<1x8xi32> to vector<8x8xi32>
    %595 = arith.cmpi eq, %3, %594 : vector<8x8xi32>
    %596 = arith.extui %595 : vector<8x8xi1> to vector<8x8xi32>
    %597 = arith.sitofp %596 : vector<8x8xi32> to vector<8x8xf32>
    %cst_185 = arith.constant 0.000000e+00 : f32
    %598 = vector.broadcast %cst_185 : f32 to vector<1x8xf32>
    %599 = arith.cmpf one, %591, %598 : vector<1x8xf32>
    %cst_186 = arith.constant dense<0xFF800000> : vector<8xf32>
    %600 = vector.multi_reduction <maximumf>, %575, %cst_186 [0] : vector<8x8xf32> to vector<8xf32>
    %601 = vector.shape_cast %600 : vector<8xf32> to vector<1x8xf32>
    %602 = vector.broadcast %601 : vector<1x8xf32> to vector<8x8xf32>
    %603 = arith.subf %575, %602 : vector<8x8xf32>
    %604 = math.exp %603 : vector<8x8xf32>
    %cst_187 = arith.constant dense<0.000000e+00> : vector<8x8xf32>
    %605 = tpu.matmul %0, %604, %cst_187 {dimension_numbers = #tpu.dot_dimension_numbers<[1], [0], [0], [1], [0, 0, 1, 1], [], []>} : vector<8x8xf32>, vector<8x8xf32>, vector<8x8xf32> -> vector<8x8xf32>
    %cst_188 = arith.constant 1.17549435E-38 : f32
    %606 = vector.broadcast %cst_188 : f32 to vector<8x8xf32>
    %607 = arith.maximumf %605, %606 : vector<8x8xf32>
    %608 = math.log %607 : vector<8x8xf32>
    %609 = vector.broadcast %601 : vector<1x8xf32> to vector<8x8xf32>
    %610 = arith.addf %608, %609 : vector<8x8xf32>
    %611 = vector.broadcast %1 : vector<8x1xf32> to vector<8x8xf32>
    %612 = arith.addf %610, %611 : vector<8x8xf32>
    %613 = arith.addf %612, %589 : vector<8x8xf32>
    %614 = vector.shape_cast %599 : vector<1x8xi1> to vector<1x8xi1>
    %615 = vector.broadcast %614 : vector<1x8xi1> to vector<8x8xi1>
    %616 = arith.select %615, %613, %575 : vector<8x8xi1>, vector<8x8xf32>
    %617 = arith.mulf %589, %597 : vector<8x8xf32>
    %cst_189 = arith.constant dense<0.000000e+00> : vector<8xf32>
    %618 = vector.multi_reduction <add>, %617, %cst_189 [0] : vector<8x8xf32> to vector<8xf32>
    %619 = vector.shape_cast %618 : vector<8xf32> to vector<1x8xf32>
    %cst_190 = arith.constant dense<0.000000e+00> : vector<8x8xf32>
    %620 = tpu.matmul %2, %556, %cst_190 {dimension_numbers = #tpu.dot_dimension_numbers<[1], [0], [0], [1], [0, 0, 1, 1], [], []>} : vector<8x8xf32>, vector<8x8xf32>, vector<8x8xf32> -> vector<8x8xf32>
    %621 = arith.mulf %620, %597 : vector<8x8xf32>
    %cst_191 = arith.constant dense<0.000000e+00> : vector<8xf32>
    %622 = vector.multi_reduction <add>, %621, %cst_191 [0] : vector<8x8xf32> to vector<8xf32>
    %623 = vector.shape_cast %622 : vector<8xf32> to vector<1x8xf32>
    %624 = arith.addf %619, %623 : vector<1x8xf32>
    %cst_192 = arith.constant 0.000000e+00 : f32
    %625 = vector.broadcast %cst_192 : f32 to vector<1x8xf32>
    %626 = arith.select %599, %624, %625 : vector<1x8xi1>, vector<1x8xf32>
    %627 = arith.addf %586, %626 : vector<1x8xf32>
    %c15_i32_193 = arith.constant 15 : i32
    %c0_194 = arith.constant 0 : index
    %c0_195 = arith.constant 0 : index
    %628 = vector.load %arg9[%c0_194, %c0_195] : memref<8x8xf32, #tpu.memory_space<vmem>>, vector<8x8xf32>
    tpu.vector_store %arg9[%c0_194, %c0_195], %616 {strides = array<i32>} : memref<8x8xf32, #tpu.memory_space<vmem>>, vector<8x8xf32>,
    %c0_196 = arith.constant 0 : index
    %c0_197 = arith.constant 0 : index
    %629 = vector.load %arg11[%c0_196, %c0_197] : memref<8x8xf32, #tpu.memory_space<vmem>>, vector<8x8xf32>
    tpu.vector_store %arg11[%c0_196, %c0_197], %597 {strides = array<i32>} : memref<8x8xf32, #tpu.memory_space<vmem>>, vector<8x8xf32>,
    %c0_198 = arith.constant 0 : index
    %c0_199 = arith.constant 0 : index
    %630 = vector.load %arg10[%c0_198, %c0_199] : memref<1x8xf32, #tpu.memory_space<vmem>>, vector<1x8xf32>
    tpu.vector_store %arg10[%c0_198, %c0_199], %627 {strides = array<i32>} : memref<1x8xf32, #tpu.memory_space<vmem>>, vector<1x8xf32>,
    %c0_i32_200 = arith.constant 0 : i32
    %631 = arith.cmpi eq, %arg1, %c0_i32_200 : i32
    %632 = arith.extui %631 : i1 to i32
    %c0_i32_201 = arith.constant 0 : i32
    %633 = arith.cmpi ne, %632, %c0_i32_201 : i32
    scf.if %633 {
      %cst_202 = arith.constant dense<0xFF800000> : vector<8xf32>
      %634 = vector.multi_reduction <maximumf>, %616, %cst_202 [0] : vector<8x8xf32> to vector<8xf32>
      %635 = vector.shape_cast %634 : vector<8xf32> to vector<1x8xf32>
      %636 = vector.broadcast %635 : vector<1x8xf32> to vector<8x8xf32>
      %637 = arith.subf %616, %636 : vector<8x8xf32>
      %638 = math.exp %637 : vector<8x8xf32>
      %cst_203 = arith.constant dense<0.000000e+00> : vector<8xf32>
      %639 = vector.multi_reduction <add>, %638, %cst_203 [0] : vector<8x8xf32> to vector<8xf32>
      %640 = vector.shape_cast %639 : vector<8xf32> to vector<1x8xf32>
      %641 = math.log %640 : vector<1x8xf32>
      %642 = arith.addf %641, %635 : vector<1x8xf32>
      %643 = arith.subf %642, %627 : vector<1x8xf32>
      %c0_204 = arith.constant 0 : index
      %c0_205 = arith.constant 0 : index
      %644 = vector.load %arg8[%c0_204, %c0_205] : memref<1x8xf32, #tpu.memory_space<vmem>>, vector<1x8xf32>
      tpu.vector_store %arg8[%c0_204, %c0_205], %643 {strides = array<i32>} : memref<1x8xf32, #tpu.memory_space<vmem>>, vector<1x8xf32>,
    } else {
    }
    return
  }
  func.func @transform_0(%arg0: i32, %arg1: i32) -> (i32, i32, i32) {
    %c0_i32 = arith.constant 0 : i32
    %c0_i32_0 = arith.constant 0 : i32
    return %arg1, %c0_i32, %arg0 : i32, i32, i32
  }
  func.func @transform_1(%arg0: i32, %arg1: i32) -> (i32, i32) {
    %c0_i32 = arith.constant 0 : i32
    return %arg1, %arg0 : i32, i32
  }
  func.func @transform_2(%arg0: i32, %arg1: i32) -> (i32, i32) {
    %c0_i32 = arith.constant 0 : i32
    return %arg1, %arg0 : i32, i32
  }
  func.func @transform_3(%arg0: i32, %arg1: i32) -> (i32, i32) {
    %c0_i32 = arith.constant 0 : i32
    %c0_i32_0 = arith.constant 0 : i32
    %c0_i32_1 = arith.constant 0 : i32
    return %c0_i32, %c0_i32_0 : i32, i32
  }
  func.func @transform_4(%arg0: i32, %arg1: i32) -> (i32, i32) {
    %c0_i32 = arith.constant 0 : i32
    %c0_i32_0 = arith.constant 0 : i32
    %c0_i32_1 = arith.constant 0 : i32
    return %c0_i32, %c0_i32_0 : i32, i32
  }
  func.func @transform_5(%arg0: i32, %arg1: i32) -> (i32, i32) {
    %c0_i32 = arith.constant 0 : i32
    %c0_i32_0 = arith.constant 0 : i32
    %c0_i32_1 = arith.constant 0 : i32
    return %c0_i32, %c0_i32_0 : i32, i32
  }
  func.func @transform_6(%arg0: i32, %arg1: i32) -> (i32, i32) {
    %c0_i32 = arith.constant 0 : i32
    %c0_i32_0 = arith.constant 0 : i32
    return %c0_i32, %arg0 : i32, i32
  }
}

</mosaic_0001>

<llo_original>
// kernel: tpu_custom_call.1
$region0: #{tpu_custom_call.1}
  #allocation0 [shape = 'u32[]', space=smem, size = 0x4, offset = 0x4, fixed_abs, tag = 'smem constant byte address 0x4 - core index']
  #allocation1 [shape = 'u32[72,128]{1,0:T(1,128)}', space=vmem, size = 0x9000, scoped, tag = 'internal scratch']
  #allocation2 [shape = 'f32[8,8]{1,0:T(8,128)}', space=vmem, size = 0x1000, scoped, tag = 'scratch operand']
  #allocation3 [shape = 'f32[1,8]{1,0:T(1,128)}', space=vmem, size = 0x200, scoped, tag = 'scratch operand']
  #allocation4 [shape = 'f32[8,8]{1,0:T(8,128)}', space=vmem, size = 0x1000, scoped, tag = 'scratch operand']
  %s0 = inlined_call_operand.vmem [shape: f32[16,8,8], index: 0, kind: input, shape index: {}]
  %s1 = inlined_call_operand.vmem [shape: s32[16,8], index: 1, kind: input, shape index: {}]
  %s2 = inlined_call_operand.vmem [shape: f32[16,8], index: 2, kind: input, shape index: {}]
  %s3 = inlined_call_operand.vmem [shape: f32[8,8], index: 3, kind: input, shape index: {}]
  %s4 = inlined_call_operand.vmem [shape: f32[8,1], index: 4, kind: input, shape index: {}]
  %s5 = inlined_call_operand.vmem [shape: f32[8,8], index: 5, kind: input, shape index: {}]
  %s6 = inlined_call_operand.hbm [shape: f32[1,8], index: 6, kind: output, shape index: {}]
  %s7 = sld [smem:[#allocation0]]
  $region46: #{tpu_custom_call.1} parent=0
    _
  %s9 = ssub.s32 1, %s7
  %s10 = scalar_select 0, %s9, %s7
  $region1: #{tpu_custom_call.1} parent=0
    #allocation5 [shape = 'u8[512]{0}', space=vmem, size = 0x400, scoped, tag = 'output window, operand 0, single buffered']
    #allocation6 [shape = 's32[1]{0}', space=sflag, size = 0x4, scoped, tag = 'scoped memory for tpu_custom_call.1']
    %11 = vsyncpa [#allocation6], 0
    // Predicated region
    $region2: #{tpu_custom_call.1} parent=1 // pred_check
      _
    $region3: #{tpu_custom_call.1} parent=1 // pred_check_branch
      %13 = sbr.rel (0) target = $region5
    $region4: #{tpu_custom_call.1} parent=1 // pred_region
      _
    $region5: #{tpu_custom_call.1} parent=1 // pred_fallthru
      _
    // Predicated region
    $region6: #{tpu_custom_call.1} parent=1 // pred_check
      _
    $region7: #{tpu_custom_call.1} parent=1 // pred_check_branch
      %15 = sbr.rel (0) target = $region9
    $region8: #{tpu_custom_call.1} parent=1 // pred_region
      _
    $region9: #{tpu_custom_call.1} parent=1 // pred_fallthru
      _
    // Predicated region
    $region10: #{tpu_custom_call.1} parent=1 // pred_check
      _
    $region11: #{tpu_custom_call.1} parent=1 // pred_check_branch
      %17 = sbr.rel (0) target = $region13
    $region12: #{tpu_custom_call.1} parent=1 // pred_region
      _
    $region13: #{tpu_custom_call.1} parent=1 // pred_fallthru
      _
    // Predicated region
    $region14: #{tpu_custom_call.1} parent=1 // pred_check
      _
    $region15: #{tpu_custom_call.1} parent=1 // pred_check_branch
      %19 = sbr.rel (0) target = $region17
    $region16: #{tpu_custom_call.1} parent=1 // pred_region
      _
    $region17: #{tpu_custom_call.1} parent=1 // pred_fallthru
      _
    // Predicated region
    $region18: #{tpu_custom_call.1} parent=1 // pred_check
      _
    $region19: #{tpu_custom_call.1} parent=1 // pred_check_branch
      %21 = sbr.rel (0) target = $region21
    $region20: #{tpu_custom_call.1} parent=1 // pred_region
      _
    $region21: #{tpu_custom_call.1} parent=1 // pred_fallthru
      _
    // Predicated region
    $region22: #{tpu_custom_call.1} parent=1 // pred_check
      _
    $region23: #{tpu_custom_call.1} parent=1 // pred_check_branch
      %23 = sbr.rel (0) target = $region25
    $region24: #{tpu_custom_call.1} parent=1 // pred_region
      _
    $region25: #{tpu_custom_call.1} parent=1 // pred_fallthru
      _
    %v24 = vld [vmem:[%s3] sm:$0xff]
    %v25 = vld [vmem:[%s4] sm:$0xff]
    %v26 = vld [vmem:[%s5] sm:$0xff]
    %v27 = vlaneseq
    %v28 = vshrl.u32 %v27, 7
    %p29 = scmp.eq.s32.totalorder 0, 0
    // Predicated region
    $region26: #{tpu_custom_call.1} parent=1 // pred_check
      %p30 = pneg %p29
    $region27: #{tpu_custom_call.1} parent=1 // pred_check_branch
      %32 = sbr.rel (%p30) target = $region29
    $region28: #{tpu_custom_call.1} parent=1 // pred_region
      %v33 = vld [vmem:[%s0] sm:$0xff]
      %v34 = vld [vmem:[%s1] sm:$0x1]
      %v35 = vld [vmem:[%s2] sm:$0x1]
      %v36 = vperm.slane %v34, 0
      %vm37 = vcmp.eq.s32.totalorder %v28, %v36
      %v38 = vsel %vm37, 1, 0
      %v39 = vcvt.s32.f32 %v38
      %vm40 = vcmask 64512
      %41 = vst.msk [vmem:[#allocation2] sm:$0xff] %vm40, %v33
      %42 = vst.msk [vmem:[#allocation4] sm:$0xff] %vm40, %v39
      %v43 = vmul.f32 %v33, %v39
      %v44 = vsel %vm40, %v43, 0.0
      %v45 = vrot.slane %v44, 4
      %v46 = vadd.f32 %v44, %v45
      %v47 = vrot.slane %v46, 2
      %v48 = vadd.f32 %v46, %v47
      %v49 = vrot.slane %v48, 1
      %v50 = vadd.f32 %v48, %v49
      %vm51 = vcmp.ne.f32.partialorder %v35, 0.0
      %v52 = vsel %vm51, %v50, 0.0
      %vm53 = vcmask 57344
      %54 = vst.msk [vmem:[#allocation3] sm:$0x1] %vm53, %v52
    $region29: #{tpu_custom_call.1} parent=1 // pred_fallthru
      _
    %p55 = scmp.gt.s32.totalorder 0, 0
    // Predicated region
    $region30: #{tpu_custom_call.1} parent=1 // pred_check
      %p56 = pneg %p55
    $region31: #{tpu_custom_call.1} parent=1 // pred_check_branch
      %58 = sbr.rel (%p56) target = $region33
    $region32: #{tpu_custom_call.1} parent=1 // pred_region
      %v59 = vld [vmem:[#allocation2] sm:$0xff]
      %v60 = vld [vmem:[#allocation4] sm:$0xff]
      %v61 = vld [vmem:[#allocation3] sm:$0x1]
      %v62 = vld [vmem:[%s0] sm:$0xff]
      %v63 = vld [vmem:[%s2] sm:$0x1]
      %v64 = vld [vmem:[%s1] sm:$0x1]
      %v65 = vperm.slane %v64, 0
      %vm66 = vcmp.eq.s32.totalorder %v28, %v65
      %v67 = vsel %vm66, 1, 0
      %v68 = vcvt.s32.f32 %v67
      %vm69 = vcmp.ne.f32.partialorder %v63, 0.0
      %vm70 = vcmask 64512
      %v71 = vsel %vm70, %v59, -inf
      %v72 = vrot.slane %v71, 4
      %v73 = vmax.f32 %v71, %v72
      %v74 = vrot.slane %v73, 2
      %v75 = vmax.f32 %v73, %v74
      %v76 = vrot.slane %v75, 1
      %v77 = vmax.f32 %v75, %v76
      %v78 = vsub.f32 %v59, %v77
      %v79 = vmul.f32 %v78, 1.442695
      %v80 = vpow.pop %v79
      %v82 = vsel %vm70, %v24, 0
      %84 = vmatpush.msra.mxu0 0.0
      %85 = vmatpush.msra.mxu0 0.0
      %86 = vmatpush.msra.mxu0 0.0
      %87 = vmatpush.msra.mxu0 0.0
      %88 = vmatpush.msra.mxu0 0.0
      %89 = vmatpush.msra.mxu0 0.0
      %90 = vmatpush.msra.mxu0 0.0
      %91 = vmatpush.msra.mxu0 0.0
      %92 = vmatpush.msra.mxu0 0.0
      %93 = vmatpush.msra.mxu0 0.0
      %94 = vmatpush.msra.mxu0 0.0
      %95 = vmatpush.msra.mxu0 0.0
      %96 = vmatpush.msra.mxu0 0.0
      %97 = vmatpush.msra.mxu0 0.0
      %98 = vmatpush.msra.mxu0 0.0
      %99 = vmatpush.msra.mxu0 %v80
      %100 = vmatmul.f32.gmra.mxu0 %v82
      %v101 = vpop.f32.mrf.mxu0
      %v102 = vadd.f32 0.0, %v101
      %103 = vdwg.mxu0
      %v104 = vmax.f32 %v102, 1.1754944e-38
      %v105 = vlog2.pop %v104
      %v106 = vmul.f32 %v105, 0.6931472
      %v107 = vadd.f32 %v106, %v77
      %109 = vset.pattern.permute.xlu0 0
      %110 = vperm.xlu0 %109, %v25
      %v111 = vpop.permute.xlu0 %110
      %v113 = vadd.f32 %v107, %v111
      %v114 = vadd.f32 %v113, %v62
      %v115 = vsel %vm69, 1, 0
      %v116 = vperm.slane %v115, 0
      %vm117 = vcmp.eq.s32.totalorder %v116, 1
      %v118 = vsel %vm117, %v114, %v59
      %v119 = vmul.f32 %v62, %v68
      %v120 = vsel %vm70, %v119, 0.0
      %v121 = vrot.slane %v120, 4
      %v122 = vadd.f32 %v120, %v121
      %v123 = vrot.slane %v122, 2
      %v124 = vadd.f32 %v122, %v123
      %v125 = vrot.slane %v124, 1
      %v126 = vadd.f32 %v124, %v125
      %v128 = vsel %vm70, %v26, 0
      %130 = vmatpush.msra.mxu0 0.0
      %131 = vmatpush.msra.mxu0 0.0
      %132 = vmatpush.msra.mxu0 0.0
      %133 = vmatpush.msra.mxu0 0.0
      %134 = vmatpush.msra.mxu0 0.0
      %135 = vmatpush.msra.mxu0 0.0
      %136 = vmatpush.msra.mxu0 0.0
      %137 = vmatpush.msra.mxu0 0.0
      %138 = vmatpush.msra.mxu0 0.0
      %139 = vmatpush.msra.mxu0 0.0
      %140 = vmatpush.msra.mxu0 0.0
      %141 = vmatpush.msra.mxu0 0.0
      %142 = vmatpush.msra.mxu0 0.0
      %143 = vmatpush.msra.mxu0 0.0
      %144 = vmatpush.msra.mxu0 0.0
      %145 = vmatpush.msra.mxu0 %v60
      %146 = vmatmul.f32.gmra.mxu0 %v128
      %v147 = vpop.f32.mrf.mxu0
      %v148 = vadd.f32 0.0, %v147
      %149 = vdwg.mxu0
      %v150 = vmul.f32 %v148, %v68
      %v151 = vsel %vm70, %v150, 0.0
      %v152 = vrot.slane %v151, 4
      %v153 = vadd.f32 %v151, %v152
      %v154 = vrot.slane %v153, 2
      %v155 = vadd.f32 %v153, %v154
      %v156 = vrot.slane %v155, 1
      %v157 = vadd.f32 %v155, %v156
      %v158 = vadd.f32 %v126, %v157
      %v159 = vsel %vm69, %v158, 0.0
      %v160 = vadd.f32 %v61, %v159
      %161 = vst.msk [vmem:[#allocation2] sm:$0xff] %vm70, %v118
      %162 = vst.msk [vmem:[#allocation4] sm:$0xff] %vm70, %v68
      %vm163 = vcmask 57344
      %164 = vst.msk [vmem:[#allocation3] sm:$0x1] %vm163, %v160
    $region33: #{tpu_custom_call.1} parent=1 // pred_fallthru
      _
    %v165 = vld [vmem:[#allocation2] sm:$0xff]
    %v166 = vld [vmem:[#allocation4] sm:$0xff]
    %v167 = vld [vmem:[#allocation3] sm:$0x1]
    %s168 = scalar_lea.vmem %s0, 8
    %v169 = vld [vmem:[%s168] sm:$0xff]
    %v170 = vld [vmem:[%s2 + $0x1] sm:$0x1]
    %v171 = vld [vmem:[%s1 + $0x1] sm:$0x1]
    %v172 = vperm.slane %v171, 0
    %vm173 = vcmp.eq.s32.totalorder %v28, %v172
    %v174 = vsel %vm173, 1, 0
    %v175 = vcvt.s32.f32 %v174
    %vm176 = vcmp.ne.f32.partialorder %v170, 0.0
    %vm177 = vcmask 64512
    %v178 = vsel %vm177, %v165, -inf
    %v179 = vrot.slane %v178, 4
    %v180 = vmax.f32 %v178, %v179
    %v181 = vrot.slane %v180, 2
    %v182 = vmax.f32 %v180, %v181
    %v183 = vrot.slane %v182, 1
    %v184 = vmax.f32 %v182, %v183
    %v185 = vsub.f32 %v165, %v184
    %v186 = vmul.f32 %v185, 1.442695
    %v187 = vpow.pop %v186
    %v189 = vsel %vm177, %v24, 0
    %191 = vmatpush.msra.mxu0 0.0
    %192 = vmatpush.msra.mxu0 0.0
    %193 = vmatpush.msra.mxu0 0.0
    %194 = vmatpush.msra.mxu0 0.0
    %195 = vmatpush.msra.mxu0 0.0
    %196 = vmatpush.msra.mxu0 0.0
    %197 = vmatpush.msra.mxu0 0.0
    %198 = vmatpush.msra.mxu0 0.0
    %199 = vmatpush.msra.mxu0 0.0
    %200 = vmatpush.msra.mxu0 0.0
    %201 = vmatpush.msra.mxu0 0.0
    %202 = vmatpush.msra.mxu0 0.0
    %203 = vmatpush.msra.mxu0 0.0
    %204 = vmatpush.msra.mxu0 0.0
    %205 = vmatpush.msra.mxu0 0.0
    %206 = vmatpush.msra.mxu0 %v187
    %207 = vmatmul.f32.gmra.mxu0 %v189
    %v208 = vpop.f32.mrf.mxu0
    %v209 = vadd.f32 0.0, %v208
    %210 = vdwg.mxu0
    %v211 = vmax.f32 %v209, 1.1754944e-38
    %v212 = vlog2.pop %v211
    %v213 = vmul.f32 %v212, 0.6931472
    %v214 = vadd.f32 %v213, %v184
    %216 = vset.pattern.permute.xlu0 0
    %217 = vperm.xlu0 %216, %v25
    %v218 = vpop.permute.xlu0 %217
    %v220 = vadd.f32 %v214, %v218
    %v221 = vadd.f32 %v220, %v169
    %v222 = vsel %vm176, 1, 0
    %v223 = vperm.slane %v222, 0
    %vm224 = vcmp.eq.s32.totalorder %v223, 1
    %v225 = vsel %vm224, %v221, %v165
    %v226 = vmul.f32 %v169, %v175
    %v227 = vsel %vm177, %v226, 0.0
    %v228 = vrot.slane %v227, 4
    %v229 = vadd.f32 %v227, %v228
    %v230 = vrot.slane %v229, 2
    %v231 = vadd.f32 %v229, %v230
    %v232 = vrot.slane %v231, 1
    %v233 = vadd.f32 %v231, %v232
    %v235 = vsel %vm177, %v26, 0
    %237 = vmatpush.msra.mxu0 0.0
    %238 = vmatpush.msra.mxu0 0.0
    %239 = vmatpush.msra.mxu0 0.0
    %240 = vmatpush.msra.mxu0 0.0
    %241 = vmatpush.msra.mxu0 0.0
    %242 = vmatpush.msra.mxu0 0.0
    %243 = vmatpush.msra.mxu0 0.0
    %244 = vmatpush.msra.mxu0 0.0
    %245 = vmatpush.msra.mxu0 0.0
    %246 = vmatpush.msra.mxu0 0.0
    %247 = vmatpush.msra.mxu0 0.0
    %248 = vmatpush.msra.mxu0 0.0
    %249 = vmatpush.msra.mxu0 0.0
    %250 = vmatpush.msra.mxu0 0.0
    %251 = vmatpush.msra.mxu0 0.0
    %252 = vmatpush.msra.mxu0 %v166
    %253 = vmatmul.f32.gmra.mxu0 %v235
    %v254 = vpop.f32.mrf.mxu0
    %v255 = vadd.f32 0.0, %v254
    %256 = vdwg.mxu0
    %v257 = vmul.f32 %v255, %v175
    %v258 = vsel %vm177, %v257, 0.0
    %v259 = vrot.slane %v258, 4
    %v260 = vadd.f32 %v258, %v259
    %v261 = vrot.slane %v260, 2
    %v262 = vadd.f32 %v260, %v261
    %v263 = vrot.slane %v262, 1
    %v264 = vadd.f32 %v262, %v263
    %v265 = vadd.f32 %v233, %v264
    %v266 = vsel %vm176, %v265, 0.0
    %v267 = vadd.f32 %v167, %v266
    %s268 = scalar_lea.vmem %s0, 16
    %v269 = vld [vmem:[%s268] sm:$0xff]
    %v270 = vld [vmem:[%s2 + $0x2] sm:$0x1]
    %v271 = vld [vmem:[%s1 + $0x2] sm:$0x1]
    %v272 = vperm.slane %v271, 0
    %vm273 = vcmp.eq.s32.totalorder %v28, %v272
    %v274 = vsel %vm273, 1, 0
    %v275 = vcvt.s32.f32 %v274
    %vm276 = vcmp.ne.f32.partialorder %v270, 0.0
    %v277 = vsel %vm177, %v225, -inf
    %v278 = vrot.slane %v277, 4
    %v279 = vmax.f32 %v277, %v278
    %v280 = vrot.slane %v279, 2
    %v281 = vmax.f32 %v279, %v280
    %v282 = vrot.slane %v281, 1
    %v283 = vmax.f32 %v281, %v282
    %v284 = vsub.f32 %v225, %v283
    %v285 = vmul.f32 %v284, 1.442695
    %v286 = vpow.pop %v285
    %287 = vmatpush.msra.mxu0 0.0
    %288 = vmatpush.msra.mxu0 0.0
    %289 = vmatpush.msra.mxu0 0.0
    %290 = vmatpush.msra.mxu0 0.0
    %291 = vmatpush.msra.mxu0 0.0
    %292 = vmatpush.msra.mxu0 0.0
    %293 = vmatpush.msra.mxu0 0.0
    %294 = vmatpush.msra.mxu0 0.0
    %295 = vmatpush.msra.mxu0 0.0
    %296 = vmatpush.msra.mxu0 0.0
    %297 = vmatpush.msra.mxu0 0.0
    %298 = vmatpush.msra.mxu0 0.0
    %299 = vmatpush.msra.mxu0 0.0
    %300 = vmatpush.msra.mxu0 0.0
    %301 = vmatpush.msra.mxu0 0.0
    %302 = vmatpush.msra.mxu0 %v286
    %303 = vmatmul.f32.gmra.mxu0 %v189
    %v304 = vpop.f32.mrf.mxu0
    %v305 = vadd.f32 0.0, %v304
    %306 = vdwg.mxu0
    %v307 = vmax.f32 %v305, 1.1754944e-38
    %v308 = vlog2.pop %v307
    %v309 = vmul.f32 %v308, 0.6931472
    %v310 = vadd.f32 %v309, %v283
    %v311 = vadd.f32 %v310, %v218
    %v312 = vadd.f32 %v311, %v269
    %v313 = vsel %vm276, 1, 0
    %v314 = vperm.slane %v313, 0
    %vm315 = vcmp.eq.s32.totalorder %v314, 1
    %v316 = vsel %vm315, %v312, %v225
    %v317 = vmul.f32 %v269, %v275
    %v318 = vsel %vm177, %v317, 0.0
    %v319 = vrot.slane %v318, 4
    %v320 = vadd.f32 %v318, %v319
    %v321 = vrot.slane %v320, 2
    %v322 = vadd.f32 %v320, %v321
    %v323 = vrot.slane %v322, 1
    %v324 = vadd.f32 %v322, %v323
    %325 = vmatpush.msra.mxu0 0.0
    %326 = vmatpush.msra.mxu0 0.0
    %327 = vmatpush.msra.mxu0 0.0
    %328 = vmatpush.msra.mxu0 0.0
    %329 = vmatpush.msra.mxu0 0.0
    %330 = vmatpush.msra.mxu0 0.0
    %331 = vmatpush.msra.mxu0 0.0
    %332 = vmatpush.msra.mxu0 0.0
    %333 = vmatpush.msra.mxu0 0.0
    %334 = vmatpush.msra.mxu0 0.0
    %335 = vmatpush.msra.mxu0 0.0
    %336 = vmatpush.msra.mxu0 0.0
    %337 = vmatpush.msra.mxu0 0.0
    %338 = vmatpush.msra.mxu0 0.0
    %339 = vmatpush.msra.mxu0 0.0
    %340 = vmatpush.msra.mxu0 %v175
    %341 = vmatmul.f32.gmra.mxu0 %v235
    %v342 = vpop.f32.mrf.mxu0
    %v343 = vadd.f32 0.0, %v342
    %344 = vdwg.mxu0
    %v345 = vmul.f32 %v343, %v275
    %v346 = vsel %vm177, %v345, 0.0
    %v347 = vrot.slane %v346, 4
    %v348 = vadd.f32 %v346, %v347
    %v349 = vrot.slane %v348, 2
    %v350 = vadd.f32 %v348, %v349
    %v351 = vrot.slane %v350, 1
    %v352 = vadd.f32 %v350, %v351
    %v353 = vadd.f32 %v324, %v352
    %v354 = vsel %vm276, %v353, 0.0
    %v355 = vadd.f32 %v267, %v354
    %s356 = scalar_lea.vmem %s0, 24
    %v357 = vld [vmem:[%s356] sm:$0xff]
    %v358 = vld [vmem:[%s2 + $0x3] sm:$0x1]
    %v359 = vld [vmem:[%s1 + $0x3] sm:$0x1]
    %v360 = vperm.slane %v359, 0
    %vm361 = vcmp.eq.s32.totalorder %v28, %v360
    %v362 = vsel %vm361, 1, 0
    %v363 = vcvt.s32.f32 %v362
    %vm364 = vcmp.ne.f32.partialorder %v358, 0.0
    %v365 = vsel %vm177, %v316, -inf
    %v366 = vrot.slane %v365, 4
    %v367 = vmax.f32 %v365, %v366
    %v368 = vrot.slane %v367, 2
    %v369 = vmax.f32 %v367, %v368
    %v370 = vrot.slane %v369, 1
    %v371 = vmax.f32 %v369, %v370
    %v372 = vsub.f32 %v316, %v371
    %v373 = vmul.f32 %v372, 1.442695
    %v374 = vpow.pop %v373
    %375 = vmatpush.msra.mxu0 0.0
    %376 = vmatpush.msra.mxu0 0.0
    %377 = vmatpush.msra.mxu0 0.0
    %378 = vmatpush.msra.mxu0 0.0
    %379 = vmatpush.msra.mxu0 0.0
    %380 = vmatpush.msra.mxu0 0.0
    %381 = vmatpush.msra.mxu0 0.0
    %382 = vmatpush.msra.mxu0 0.0
    %383 = vmatpush.msra.mxu0 0.0
    %384 = vmatpush.msra.mxu0 0.0
    %385 = vmatpush.msra.mxu0 0.0
    %386 = vmatpush.msra.mxu0 0.0
    %387 = vmatpush.msra.mxu0 0.0
    %388 = vmatpush.msra.mxu0 0.0
    %389 = vmatpush.msra.mxu0 0.0
    %390 = vmatpush.msra.mxu0 %v374
    %391 = vmatmul.f32.gmra.mxu0 %v189
    %v392 = vpop.f32.mrf.mxu0
    %v393 = vadd.f32 0.0, %v392
    %394 = vdwg.mxu0
    %v395 = vmax.f32 %v393, 1.1754944e-38
    %v396 = vlog2.pop %v395
    %v397 = vmul.f32 %v396, 0.6931472
    %v398 = vadd.f32 %v397, %v371
    %v399 = vadd.f32 %v398, %v218
    %v400 = vadd.f32 %v399, %v357
    %v401 = vsel %vm364, 1, 0
    %v402 = vperm.slane %v401, 0
    %vm403 = vcmp.eq.s32.totalorder %v402, 1
    %v404 = vsel %vm403, %v400, %v316
    %v405 = vmul.f32 %v357, %v363
    %v406 = vsel %vm177, %v405, 0.0
    %v407 = vrot.slane %v406, 4
    %v408 = vadd.f32 %v406, %v407
    %v409 = vrot.slane %v408, 2
    %v410 = vadd.f32 %v408, %v409
    %v411 = vrot.slane %v410, 1
    %v412 = vadd.f32 %v410, %v411
    %413 = vmatpush.msra.mxu0 0.0
    %414 = vmatpush.msra.mxu0 0.0
    %415 = vmatpush.msra.mxu0 0.0
    %416 = vmatpush.msra.mxu0 0.0
    %417 = vmatpush.msra.mxu0 0.0
    %418 = vmatpush.msra.mxu0 0.0
    %419 = vmatpush.msra.mxu0 0.0
    %420 = vmatpush.msra.mxu0 0.0
    %421 = vmatpush.msra.mxu0 0.0
    %422 = vmatpush.msra.mxu0 0.0
    %423 = vmatpush.msra.mxu0 0.0
    %424 = vmatpush.msra.mxu0 0.0
    %425 = vmatpush.msra.mxu0 0.0
    %426 = vmatpush.msra.mxu0 0.0
    %427 = vmatpush.msra.mxu0 0.0
    %428 = vmatpush.msra.mxu0 %v275
    %429 = vmatmul.f32.gmra.mxu0 %v235
    %v430 = vpop.f32.mrf.mxu0
    %v431 = vadd.f32 0.0, %v430
    %432 = vdwg.mxu0
    %v433 = vmul.f32 %v431, %v363
    %v434 = vsel %vm177, %v433, 0.0
    %v435 = vrot.slane %v434, 4
    %v436 = vadd.f32 %v434, %v435
    %v437 = vrot.slane %v436, 2
    %v438 = vadd.f32 %v436, %v437
    %v439 = vrot.slane %v438, 1
    %v440 = vadd.f32 %v438, %v439
    %v441 = vadd.f32 %v412, %v440
    %v442 = vsel %vm364, %v441, 0.0
    %v443 = vadd.f32 %v355, %v442
    %s444 = scalar_lea.vmem %s0, 32
    %v445 = vld [vmem:[%s444] sm:$0xff]
    %v446 = vld [vmem:[%s2 + $0x4] sm:$0x1]
    %v447 = vld [vmem:[%s1 + $0x4] sm:$0x1]
    %v448 = vperm.slane %v447, 0
    %vm449 = vcmp.eq.s32.totalorder %v28, %v448
    %v450 = vsel %vm449, 1, 0
    %v451 = vcvt.s32.f32 %v450
    %vm452 = vcmp.ne.f32.partialorder %v446, 0.0
    %v453 = vsel %vm177, %v404, -inf
    %v454 = vrot.slane %v453, 4
    %v455 = vmax.f32 %v453, %v454
    %v456 = vrot.slane %v455, 2
    %v457 = vmax.f32 %v455, %v456
    %v458 = vrot.slane %v457, 1
    %v459 = vmax.f32 %v457, %v458
    %v460 = vsub.f32 %v404, %v459
    %v461 = vmul.f32 %v460, 1.442695
    %v462 = vpow.pop %v461
    %463 = vmatpush.msra.mxu0 0.0
    %464 = vmatpush.msra.mxu0 0.0
    %465 = vmatpush.msra.mxu0 0.0
    %466 = vmatpush.msra.mxu0 0.0
    %467 = vmatpush.msra.mxu0 0.0
    %468 = vmatpush.msra.mxu0 0.0
    %469 = vmatpush.msra.mxu0 0.0
    %470 = vmatpush.msra.mxu0 0.0
    %471 = vmatpush.msra.mxu0 0.0
    %472 = vmatpush.msra.mxu0 0.0
    %473 = vmatpush.msra.mxu0 0.0
    %474 = vmatpush.msra.mxu0 0.0
    %475 = vmatpush.msra.mxu0 0.0
    %476 = vmatpush.msra.mxu0 0.0
    %477 = vmatpush.msra.mxu0 0.0
    %478 = vmatpush.msra.mxu0 %v462
    %479 = vmatmul.f32.gmra.mxu0 %v189
    %v480 = vpop.f32.mrf.mxu0
    %v481 = vadd.f32 0.0, %v480
    %482 = vdwg.mxu0
    %v483 = vmax.f32 %v481, 1.1754944e-38
    %v484 = vlog2.pop %v483
    %v485 = vmul.f32 %v484, 0.6931472
    %v486 = vadd.f32 %v485, %v459
    %v487 = vadd.f32 %v486, %v218
    %v488 = vadd.f32 %v487, %v445
    %v489 = vsel %vm452, 1, 0
    %v490 = vperm.slane %v489, 0
    %vm491 = vcmp.eq.s32.totalorder %v490, 1
    %v492 = vsel %vm491, %v488, %v404
    %v493 = vmul.f32 %v445, %v451
    %v494 = vsel %vm177, %v493, 0.0
    %v495 = vrot.slane %v494, 4
    %v496 = vadd.f32 %v494, %v495
    %v497 = vrot.slane %v496, 2
    %v498 = vadd.f32 %v496, %v497
    %v499 = vrot.slane %v498, 1
    %v500 = vadd.f32 %v498, %v499
    %501 = vmatpush.msra.mxu0 0.0
    %502 = vmatpush.msra.mxu0 0.0
    %503 = vmatpush.msra.mxu0 0.0
    %504 = vmatpush.msra.mxu0 0.0
    %505 = vmatpush.msra.mxu0 0.0
    %506 = vmatpush.msra.mxu0 0.0
    %507 = vmatpush.msra.mxu0 0.0
    %508 = vmatpush.msra.mxu0 0.0
    %509 = vmatpush.msra.mxu0 0.0
    %510 = vmatpush.msra.mxu0 0.0
    %511 = vmatpush.msra.mxu0 0.0
    %512 = vmatpush.msra.mxu0 0.0
    %513 = vmatpush.msra.mxu0 0.0
    %514 = vmatpush.msra.mxu0 0.0
    %515 = vmatpush.msra.mxu0 0.0
    %516 = vmatpush.msra.mxu0 %v363
    %517 = vmatmul.f32.gmra.mxu0 %v235
    %v518 = vpop.f32.mrf.mxu0
    %v519 = vadd.f32 0.0, %v518
    %520 = vdwg.mxu0
    %v521 = vmul.f32 %v519, %v451
    %v522 = vsel %vm177, %v521, 0.0
    %v523 = vrot.slane %v522, 4
    %v524 = vadd.f32 %v522, %v523
    %v525 = vrot.slane %v524, 2
    %v526 = vadd.f32 %v524, %v525
    %v527 = vrot.slane %v526, 1
    %v528 = vadd.f32 %v526, %v527
    %v529 = vadd.f32 %v500, %v528
    %v530 = vsel %vm452, %v529, 0.0
    %v531 = vadd.f32 %v443, %v530
    %s532 = scalar_lea.vmem %s0, 40
    %v533 = vld [vmem:[%s532] sm:$0xff]
    %v534 = vld [vmem:[%s2 + $0x5] sm:$0x1]
    %v535 = vld [vmem:[%s1 + $0x5] sm:$0x1]
    %v536 = vperm.slane %v535, 0
    %vm537 = vcmp.eq.s32.totalorder %v28, %v536
    %v538 = vsel %vm537, 1, 0
    %v539 = vcvt.s32.f32 %v538
    %vm540 = vcmp.ne.f32.partialorder %v534, 0.0
    %v541 = vsel %vm177, %v492, -inf
    %v542 = vrot.slane %v541, 4
    %v543 = vmax.f32 %v541, %v542
    %v544 = vrot.slane %v543, 2
    %v545 = vmax.f32 %v543, %v544
    %v546 = vrot.slane %v545, 1
    %v547 = vmax.f32 %v545, %v546
    %v548 = vsub.f32 %v492, %v547
    %v549 = vmul.f32 %v548, 1.442695
    %v550 = vpow.pop %v549
    %551 = vmatpush.msra.mxu0 0.0
    %552 = vmatpush.msra.mxu0 0.0
    %553 = vmatpush.msra.mxu0 0.0
    %554 = vmatpush.msra.mxu0 0.0
    %555 = vmatpush.msra.mxu0 0.0
    %556 = vmatpush.msra.mxu0 0.0
    %557 = vmatpush.msra.mxu0 0.0
    %558 = vmatpush.msra.mxu0 0.0
    %559 = vmatpush.msra.mxu0 0.0
    %560 = vmatpush.msra.mxu0 0.0
    %561 = vmatpush.msra.mxu0 0.0
    %562 = vmatpush.msra.mxu0 0.0
    %563 = vmatpush.msra.mxu0 0.0
    %564 = vmatpush.msra.mxu0 0.0
    %565 = vmatpush.msra.mxu0 0.0
    %566 = vmatpush.msra.mxu0 %v550
    %567 = vmatmul.f32.gmra.mxu0 %v189
    %v568 = vpop.f32.mrf.mxu0
    %v569 = vadd.f32 0.0, %v568
    %570 = vdwg.mxu0
    %v571 = vmax.f32 %v569, 1.1754944e-38
    %v572 = vlog2.pop %v571
    %v573 = vmul.f32 %v572, 0.6931472
    %v574 = vadd.f32 %v573, %v547
    %v575 = vadd.f32 %v574, %v218
    %v576 = vadd.f32 %v575, %v533
    %v577 = vsel %vm540, 1, 0
    %v578 = vperm.slane %v577, 0
    %vm579 = vcmp.eq.s32.totalorder %v578, 1
    %v580 = vsel %vm579, %v576, %v492
    %v581 = vmul.f32 %v533, %v539
    %v582 = vsel %vm177, %v581, 0.0
    %v583 = vrot.slane %v582, 4
    %v584 = vadd.f32 %v582, %v583
    %v585 = vrot.slane %v584, 2
    %v586 = vadd.f32 %v584, %v585
    %v587 = vrot.slane %v586, 1
    %v588 = vadd.f32 %v586, %v587
    %589 = vmatpush.msra.mxu0 0.0
    %590 = vmatpush.msra.mxu0 0.0
    %591 = vmatpush.msra.mxu0 0.0
    %592 = vmatpush.msra.mxu0 0.0
    %593 = vmatpush.msra.mxu0 0.0
    %594 = vmatpush.msra.mxu0 0.0
    %595 = vmatpush.msra.mxu0 0.0
    %596 = vmatpush.msra.mxu0 0.0
    %597 = vmatpush.msra.mxu0 0.0
    %598 = vmatpush.msra.mxu0 0.0
    %599 = vmatpush.msra.mxu0 0.0
    %600 = vmatpush.msra.mxu0 0.0
    %601 = vmatpush.msra.mxu0 0.0
    %602 = vmatpush.msra.mxu0 0.0
    %603 = vmatpush.msra.mxu0 0.0
    %604 = vmatpush.msra.mxu0 %v451
    %605 = vmatmul.f32.gmra.mxu0 %v235
    %v606 = vpop.f32.mrf.mxu0
    %v607 = vadd.f32 0.0, %v606
    %608 = vdwg.mxu0
    %v609 = vmul.f32 %v607, %v539
    %v610 = vsel %vm177, %v609, 0.0
    %v611 = vrot.slane %v610, 4
    %v612 = vadd.f32 %v610, %v611
    %v613 = vrot.slane %v612, 2
    %v614 = vadd.f32 %v612, %v613
    %v615 = vrot.slane %v614, 1
    %v616 = vadd.f32 %v614, %v615
    %v617 = vadd.f32 %v588, %v616
    %v618 = vsel %vm540, %v617, 0.0
    %v619 = vadd.f32 %v531, %v618
    %s620 = scalar_lea.vmem %s0, 48
    %v621 = vld [vmem:[%s620] sm:$0xff]
    %v622 = vld [vmem:[%s2 + $0x6] sm:$0x1]
    %v623 = vld [vmem:[%s1 + $0x6] sm:$0x1]
    %v624 = vperm.slane %v623, 0
    %vm625 = vcmp.eq.s32.totalorder %v28, %v624
    %v626 = vsel %vm625, 1, 0
    %v627 = vcvt.s32.f32 %v626
    %vm628 = vcmp.ne.f32.partialorder %v622, 0.0
    %v629 = vsel %vm177, %v580, -inf
    %v630 = vrot.slane %v629, 4
    %v631 = vmax.f32 %v629, %v630
    %v632 = vrot.slane %v631, 2
    %v633 = vmax.f32 %v631, %v632
    %v634 = vrot.slane %v633, 1
    %v635 = vmax.f32 %v633, %v634
    %v636 = vsub.f32 %v580, %v635
    %v637 = vmul.f32 %v636, 1.442695
    %v638 = vpow.pop %v637
    %639 = vmatpush.msra.mxu0 0.0
    %640 = vmatpush.msra.mxu0 0.0
    %641 = vmatpush.msra.mxu0 0.0
    %642 = vmatpush.msra.mxu0 0.0
    %643 = vmatpush.msra.mxu0 0.0
    %644 = vmatpush.msra.mxu0 0.0
    %645 = vmatpush.msra.mxu0 0.0
    %646 = vmatpush.msra.mxu0 0.0
    %647 = vmatpush.msra.mxu0 0.0
    %648 = vmatpush.msra.mxu0 0.0
    %649 = vmatpush.msra.mxu0 0.0
    %650 = vmatpush.msra.mxu0 0.0
    %651 = vmatpush.msra.mxu0 0.0
    %652 = vmatpush.msra.mxu0 0.0
    %653 = vmatpush.msra.mxu0 0.0
    %654 = vmatpush.msra.mxu0 %v638
    %655 = vmatmul.f32.gmra.mxu0 %v189
    %v656 = vpop.f32.mrf.mxu0
    %v657 = vadd.f32 0.0, %v656
    %658 = vdwg.mxu0
    %v659 = vmax.f32 %v657, 1.1754944e-38
    %v660 = vlog2.pop %v659
    %v661 = vmul.f32 %v660, 0.6931472
    %v662 = vadd.f32 %v661, %v635
    %v663 = vadd.f32 %v662, %v218
    %v664 = vadd.f32 %v663, %v621
    %v665 = vsel %vm628, 1, 0
    %v666 = vperm.slane %v665, 0
    %vm667 = vcmp.eq.s32.totalorder %v666, 1
    %v668 = vsel %vm667, %v664, %v580
    %v669 = vmul.f32 %v621, %v627
    %v670 = vsel %vm177, %v669, 0.0
    %v671 = vrot.slane %v670, 4
    %v672 = vadd.f32 %v670, %v671
    %v673 = vrot.slane %v672, 2
    %v674 = vadd.f32 %v672, %v673
    %v675 = vrot.slane %v674, 1
    %v676 = vadd.f32 %v674, %v675
    %677 = vmatpush.msra.mxu0 0.0
    %678 = vmatpush.msra.mxu0 0.0
    %679 = vmatpush.msra.mxu0 0.0
    %680 = vmatpush.msra.mxu0 0.0
    %681 = vmatpush.msra.mxu0 0.0
    %682 = vmatpush.msra.mxu0 0.0
    %683 = vmatpush.msra.mxu0 0.0
    %684 = vmatpush.msra.mxu0 0.0
    %685 = vmatpush.msra.mxu0 0.0
    %686 = vmatpush.msra.mxu0 0.0
    %687 = vmatpush.msra.mxu0 0.0
    %688 = vmatpush.msra.mxu0 0.0
    %689 = vmatpush.msra.mxu0 0.0
    %690 = vmatpush.msra.mxu0 0.0
    %691 = vmatpush.msra.mxu0 0.0
    %692 = vmatpush.msra.mxu0 %v539
    %693 = vmatmul.f32.gmra.mxu0 %v235
    %v694 = vpop.f32.mrf.mxu0
    %v695 = vadd.f32 0.0, %v694
    %696 = vdwg.mxu0
    %v697 = vmul.f32 %v695, %v627
    %v698 = vsel %vm177, %v697, 0.0
    %v699 = vrot.slane %v698, 4
    %v700 = vadd.f32 %v698, %v699
    %v701 = vrot.slane %v700, 2
    %v702 = vadd.f32 %v700, %v701
    %v703 = vrot.slane %v702, 1
    %v704 = vadd.f32 %v702, %v703
    %v705 = vadd.f32 %v676, %v704
    %v706 = vsel %vm628, %v705, 0.0
    %v707 = vadd.f32 %v619, %v706
    %s708 = scalar_lea.vmem %s0, 56
    %v709 = vld [vmem:[%s708] sm:$0xff]
    %v710 = vld [vmem:[%s2 + $0x7] sm:$0x1]
    %v711 = vld [vmem:[%s1 + $0x7] sm:$0x1]
    %v712 = vperm.slane %v711, 0
    %vm713 = vcmp.eq.s32.totalorder %v28, %v712
    %v714 = vsel %vm713, 1, 0
    %v715 = vcvt.s32.f32 %v714
    %vm716 = vcmp.ne.f32.partialorder %v710, 0.0
    %v717 = vsel %vm177, %v668, -inf
    %v718 = vrot.slane %v717, 4
    %v719 = vmax.f32 %v717, %v718
    %v720 = vrot.slane %v719, 2
    %v721 = vmax.f32 %v719, %v720
    %v722 = vrot.slane %v721, 1
    %v723 = vmax.f32 %v721, %v722
    %v724 = vsub.f32 %v668, %v723
    %v725 = vmul.f32 %v724, 1.442695
    %v726 = vpow.pop %v725
    %727 = vmatpush.msra.mxu0 0.0
    %728 = vmatpush.msra.mxu0 0.0
    %729 = vmatpush.msra.mxu0 0.0
    %730 = vmatpush.msra.mxu0 0.0
    %731 = vmatpush.msra.mxu0 0.0
    %732 = vmatpush.msra.mxu0 0.0
    %733 = vmatpush.msra.mxu0 0.0
    %734 = vmatpush.msra.mxu0 0.0
    %735 = vmatpush.msra.mxu0 0.0
    %736 = vmatpush.msra.mxu0 0.0
    %737 = vmatpush.msra.mxu0 0.0
    %738 = vmatpush.msra.mxu0 0.0
    %739 = vmatpush.msra.mxu0 0.0
    %740 = vmatpush.msra.mxu0 0.0
    %741 = vmatpush.msra.mxu0 0.0
    %742 = vmatpush.msra.mxu0 %v726
    %743 = vmatmul.f32.gmra.mxu0 %v189
    %v744 = vpop.f32.mrf.mxu0
    %v745 = vadd.f32 0.0, %v744
    %746 = vdwg.mxu0
    %v747 = vmax.f32 %v745, 1.1754944e-38
    %v748 = vlog2.pop %v747
    %v749 = vmul.f32 %v748, 0.6931472
    %v750 = vadd.f32 %v749, %v723
    %v751 = vadd.f32 %v750, %v218
    %v752 = vadd.f32 %v751, %v709
    %v753 = vsel %vm716, 1, 0
    %v754 = vperm.slane %v753, 0
    %vm755 = vcmp.eq.s32.totalorder %v754, 1
    %v756 = vsel %vm755, %v752, %v668
    %v757 = vmul.f32 %v709, %v715
    %v758 = vsel %vm177, %v757, 0.0
    %v759 = vrot.slane %v758, 4
    %v760 = vadd.f32 %v758, %v759
    %v761 = vrot.slane %v760, 2
    %v762 = vadd.f32 %v760, %v761
    %v763 = vrot.slane %v762, 1
    %v764 = vadd.f32 %v762, %v763
    %765 = vmatpush.msra.mxu0 0.0
    %766 = vmatpush.msra.mxu0 0.0
    %767 = vmatpush.msra.mxu0 0.0
    %768 = vmatpush.msra.mxu0 0.0
    %769 = vmatpush.msra.mxu0 0.0
    %770 = vmatpush.msra.mxu0 0.0
    %771 = vmatpush.msra.mxu0 0.0
    %772 = vmatpush.msra.mxu0 0.0
    %773 = vmatpush.msra.mxu0 0.0
    %774 = vmatpush.msra.mxu0 0.0
    %775 = vmatpush.msra.mxu0 0.0
    %776 = vmatpush.msra.mxu0 0.0
    %777 = vmatpush.msra.mxu0 0.0
    %778 = vmatpush.msra.mxu0 0.0
    %779 = vmatpush.msra.mxu0 0.0
    %780 = vmatpush.msra.mxu0 %v627
    %781 = vmatmul.f32.gmra.mxu0 %v235
    %v782 = vpop.f32.mrf.mxu0
    %v783 = vadd.f32 0.0, %v782
    %784 = vdwg.mxu0
    %v785 = vmul.f32 %v783, %v715
    %v786 = vsel %vm177, %v785, 0.0
    %v787 = vrot.slane %v786, 4
    %v788 = vadd.f32 %v786, %v787
    %v789 = vrot.slane %v788, 2
    %v790 = vadd.f32 %v788, %v789
    %v791 = vrot.slane %v790, 1
    %v792 = vadd.f32 %v790, %v791
    %v793 = vadd.f32 %v764, %v792
    %v794 = vsel %vm716, %v793, 0.0
    %v795 = vadd.f32 %v707, %v794
    %s796 = scalar_lea.vmem %s0, 64
    %v797 = vld [vmem:[%s796] sm:$0xff]
    %v798 = vld [vmem:[%s2 + $0x8] sm:$0x1]
    %v799 = vld [vmem:[%s1 + $0x8] sm:$0x1]
    %v800 = vperm.slane %v799, 0
    %vm801 = vcmp.eq.s32.totalorder %v28, %v800
    %v802 = vsel %vm801, 1, 0
    %v803 = vcvt.s32.f32 %v802
    %vm804 = vcmp.ne.f32.partialorder %v798, 0.0
    %v805 = vsel %vm177, %v756, -inf
    %v806 = vrot.slane %v805, 4
    %v807 = vmax.f32 %v805, %v806
    %v808 = vrot.slane %v807, 2
    %v809 = vmax.f32 %v807, %v808
    %v810 = vrot.slane %v809, 1
    %v811 = vmax.f32 %v809, %v810
    %v812 = vsub.f32 %v756, %v811
    %v813 = vmul.f32 %v812, 1.442695
    %v814 = vpow.pop %v813
    %815 = vmatpush.msra.mxu0 0.0
    %816 = vmatpush.msra.mxu0 0.0
    %817 = vmatpush.msra.mxu0 0.0
    %818 = vmatpush.msra.mxu0 0.0
    %819 = vmatpush.msra.mxu0 0.0
    %820 = vmatpush.msra.mxu0 0.0
    %821 = vmatpush.msra.mxu0 0.0
    %822 = vmatpush.msra.mxu0 0.0
    %823 = vmatpush.msra.mxu0 0.0
    %824 = vmatpush.msra.mxu0 0.0
    %825 = vmatpush.msra.mxu0 0.0
    %826 = vmatpush.msra.mxu0 0.0
    %827 = vmatpush.msra.mxu0 0.0
    %828 = vmatpush.msra.mxu0 0.0
    %829 = vmatpush.msra.mxu0 0.0
    %830 = vmatpush.msra.mxu0 %v814
    %831 = vmatmul.f32.gmra.mxu0 %v189
    %v832 = vpop.f32.mrf.mxu0
    %v833 = vadd.f32 0.0, %v832
    %834 = vdwg.mxu0
    %v835 = vmax.f32 %v833, 1.1754944e-38
    %v836 = vlog2.pop %v835
    %v837 = vmul.f32 %v836, 0.6931472
    %v838 = vadd.f32 %v837, %v811
    %v839 = vadd.f32 %v838, %v218
    %v840 = vadd.f32 %v839, %v797
    %v841 = vsel %vm804, 1, 0
    %v842 = vperm.slane %v841, 0
    %vm843 = vcmp.eq.s32.totalorder %v842, 1
    %v844 = vsel %vm843, %v840, %v756
    %v845 = vmul.f32 %v797, %v803
    %v846 = vsel %vm177, %v845, 0.0
    %v847 = vrot.slane %v846, 4
    %v848 = vadd.f32 %v846, %v847
    %v849 = vrot.slane %v848, 2
    %v850 = vadd.f32 %v848, %v849
    %v851 = vrot.slane %v850, 1
    %v852 = vadd.f32 %v850, %v851
    %853 = vmatpush.msra.mxu0 0.0
    %854 = vmatpush.msra.mxu0 0.0
    %855 = vmatpush.msra.mxu0 0.0
    %856 = vmatpush.msra.mxu0 0.0
    %857 = vmatpush.msra.mxu0 0.0
    %858 = vmatpush.msra.mxu0 0.0
    %859 = vmatpush.msra.mxu0 0.0
    %860 = vmatpush.msra.mxu0 0.0
    %861 = vmatpush.msra.mxu0 0.0
    %862 = vmatpush.msra.mxu0 0.0
    %863 = vmatpush.msra.mxu0 0.0
    %864 = vmatpush.msra.mxu0 0.0
    %865 = vmatpush.msra.mxu0 0.0
    %866 = vmatpush.msra.mxu0 0.0
    %867 = vmatpush.msra.mxu0 0.0
    %868 = vmatpush.msra.mxu0 %v715
    %869 = vmatmul.f32.gmra.mxu0 %v235
    %v870 = vpop.f32.mrf.mxu0
    %v871 = vadd.f32 0.0, %v870
    %872 = vdwg.mxu0
    %v873 = vmul.f32 %v871, %v803
    %v874 = vsel %vm177, %v873, 0.0
    %v875 = vrot.slane %v874, 4
    %v876 = vadd.f32 %v874, %v875
    %v877 = vrot.slane %v876, 2
    %v878 = vadd.f32 %v876, %v877
    %v879 = vrot.slane %v878, 1
    %v880 = vadd.f32 %v878, %v879
    %v881 = vadd.f32 %v852, %v880
    %v882 = vsel %vm804, %v881, 0.0
    %v883 = vadd.f32 %v795, %v882
    %s884 = scalar_lea.vmem %s0, 72
    %v885 = vld [vmem:[%s884] sm:$0xff]
    %v886 = vld [vmem:[%s2 + $0x9] sm:$0x1]
    %v887 = vld [vmem:[%s1 + $0x9] sm:$0x1]
    %v888 = vperm.slane %v887, 0
    %vm889 = vcmp.eq.s32.totalorder %v28, %v888
    %v890 = vsel %vm889, 1, 0
    %v891 = vcvt.s32.f32 %v890
    %vm892 = vcmp.ne.f32.partialorder %v886, 0.0
    %v893 = vsel %vm177, %v844, -inf
    %v894 = vrot.slane %v893, 4
    %v895 = vmax.f32 %v893, %v894
    %v896 = vrot.slane %v895, 2
    %v897 = vmax.f32 %v895, %v896
    %v898 = vrot.slane %v897, 1
    %v899 = vmax.f32 %v897, %v898
    %v900 = vsub.f32 %v844, %v899
    %v901 = vmul.f32 %v900, 1.442695
    %v902 = vpow.pop %v901
    %903 = vmatpush.msra.mxu0 0.0
    %904 = vmatpush.msra.mxu0 0.0
    %905 = vmatpush.msra.mxu0 0.0
    %906 = vmatpush.msra.mxu0 0.0
    %907 = vmatpush.msra.mxu0 0.0
    %908 = vmatpush.msra.mxu0 0.0
    %909 = vmatpush.msra.mxu0 0.0
    %910 = vmatpush.msra.mxu0 0.0
    %911 = vmatpush.msra.mxu0 0.0
    %912 = vmatpush.msra.mxu0 0.0
    %913 = vmatpush.msra.mxu0 0.0
    %914 = vmatpush.msra.mxu0 0.0
    %915 = vmatpush.msra.mxu0 0.0
    %916 = vmatpush.msra.mxu0 0.0
    %917 = vmatpush.msra.mxu0 0.0
    %918 = vmatpush.msra.mxu0 %v902
    %919 = vmatmul.f32.gmra.mxu0 %v189
    %v920 = vpop.f32.mrf.mxu0
    %v921 = vadd.f32 0.0, %v920
    %922 = vdwg.mxu0
    %v923 = vmax.f32 %v921, 1.1754944e-38
    %v924 = vlog2.pop %v923
    %v925 = vmul.f32 %v924, 0.6931472
    %v926 = vadd.f32 %v925, %v899
    %v927 = vadd.f32 %v926, %v218
    %v928 = vadd.f32 %v927, %v885
    %v929 = vsel %vm892, 1, 0
    %v930 = vperm.slane %v929, 0
    %vm931 = vcmp.eq.s32.totalorder %v930, 1
    %v932 = vsel %vm931, %v928, %v844
    %v933 = vmul.f32 %v885, %v891
    %v934 = vsel %vm177, %v933, 0.0
    %v935 = vrot.slane %v934, 4
    %v936 = vadd.f32 %v934, %v935
    %v937 = vrot.slane %v936, 2
    %v938 = vadd.f32 %v936, %v937
    %v939 = vrot.slane %v938, 1
    %v940 = vadd.f32 %v938, %v939
    %941 = vmatpush.msra.mxu0 0.0
    %942 = vmatpush.msra.mxu0 0.0
    %943 = vmatpush.msra.mxu0 0.0
    %944 = vmatpush.msra.mxu0 0.0
    %945 = vmatpush.msra.mxu0 0.0
    %946 = vmatpush.msra.mxu0 0.0
    %947 = vmatpush.msra.mxu0 0.0
    %948 = vmatpush.msra.mxu0 0.0
    %949 = vmatpush.msra.mxu0 0.0
    %950 = vmatpush.msra.mxu0 0.0
    %951 = vmatpush.msra.mxu0 0.0
    %952 = vmatpush.msra.mxu0 0.0
    %953 = vmatpush.msra.mxu0 0.0
    %954 = vmatpush.msra.mxu0 0.0
    %955 = vmatpush.msra.mxu0 0.0
    %956 = vmatpush.msra.mxu0 %v803
    %957 = vmatmul.f32.gmra.mxu0 %v235
    %v958 = vpop.f32.mrf.mxu0
    %v959 = vadd.f32 0.0, %v958
    %960 = vdwg.mxu0
    %v961 = vmul.f32 %v959, %v891
    %v962 = vsel %vm177, %v961, 0.0
    %v963 = vrot.slane %v962, 4
    %v964 = vadd.f32 %v962, %v963
    %v965 = vrot.slane %v964, 2
    %v966 = vadd.f32 %v964, %v965
    %v967 = vrot.slane %v966, 1
    %v968 = vadd.f32 %v966, %v967
    %v969 = vadd.f32 %v940, %v968
    %v970 = vsel %vm892, %v969, 0.0
    %v971 = vadd.f32 %v883, %v970
    %s972 = scalar_lea.vmem %s0, 80
    %v973 = vld [vmem:[%s972] sm:$0xff]
    %v974 = vld [vmem:[%s2 + $0xa] sm:$0x1]
    %v975 = vld [vmem:[%s1 + $0xa] sm:$0x1]
    %v976 = vperm.slane %v975, 0
    %vm977 = vcmp.eq.s32.totalorder %v28, %v976
    %v978 = vsel %vm977, 1, 0
    %v979 = vcvt.s32.f32 %v978
    %vm980 = vcmp.ne.f32.partialorder %v974, 0.0
    %v981 = vsel %vm177, %v932, -inf
    %v982 = vrot.slane %v981, 4
    %v983 = vmax.f32 %v981, %v982
    %v984 = vrot.slane %v983, 2
    %v985 = vmax.f32 %v983, %v984
    %v986 = vrot.slane %v985, 1
    %v987 = vmax.f32 %v985, %v986
    %v988 = vsub.f32 %v932, %v987
    %v989 = vmul.f32 %v988, 1.442695
    %v990 = vpow.pop %v989
    %991 = vmatpush.msra.mxu0 0.0
    %992 = vmatpush.msra.mxu0 0.0
    %993 = vmatpush.msra.mxu0 0.0
    %994 = vmatpush.msra.mxu0 0.0
    %995 = vmatpush.msra.mxu0 0.0
    %996 = vmatpush.msra.mxu0 0.0
    %997 = vmatpush.msra.mxu0 0.0
    %998 = vmatpush.msra.mxu0 0.0
    %999 = vmatpush.msra.mxu0 0.0
    %1000 = vmatpush.msra.mxu0 0.0
    %1001 = vmatpush.msra.mxu0 0.0
    %1002 = vmatpush.msra.mxu0 0.0
    %1003 = vmatpush.msra.mxu0 0.0
    %1004 = vmatpush.msra.mxu0 0.0
    %1005 = vmatpush.msra.mxu0 0.0
    %1006 = vmatpush.msra.mxu0 %v990
    %1007 = vmatmul.f32.gmra.mxu0 %v189
    %v1008 = vpop.f32.mrf.mxu0
    %v1009 = vadd.f32 0.0, %v1008
    %1010 = vdwg.mxu0
    %v1011 = vmax.f32 %v1009, 1.1754944e-38
    %v1012 = vlog2.pop %v1011
    %v1013 = vmul.f32 %v1012, 0.6931472
    %v1014 = vadd.f32 %v1013, %v987
    %v1015 = vadd.f32 %v1014, %v218
    %v1016 = vadd.f32 %v1015, %v973
    %v1017 = vsel %vm980, 1, 0
    %v1018 = vperm.slane %v1017, 0
    %vm1019 = vcmp.eq.s32.totalorder %v1018, 1
    %v1020 = vsel %vm1019, %v1016, %v932
    %v1021 = vmul.f32 %v973, %v979
    %v1022 = vsel %vm177, %v1021, 0.0
    %v1023 = vrot.slane %v1022, 4
    %v1024 = vadd.f32 %v1022, %v1023
    %v1025 = vrot.slane %v1024, 2
    %v1026 = vadd.f32 %v1024, %v1025
    %v1027 = vrot.slane %v1026, 1
    %v1028 = vadd.f32 %v1026, %v1027
    %1029 = vmatpush.msra.mxu0 0.0
    %1030 = vmatpush.msra.mxu0 0.0
    %1031 = vmatpush.msra.mxu0 0.0
    %1032 = vmatpush.msra.mxu0 0.0
    %1033 = vmatpush.msra.mxu0 0.0
    %1034 = vmatpush.msra.mxu0 0.0
    %1035 = vmatpush.msra.mxu0 0.0
    %1036 = vmatpush.msra.mxu0 0.0
    %1037 = vmatpush.msra.mxu0 0.0
    %1038 = vmatpush.msra.mxu0 0.0
    %1039 = vmatpush.msra.mxu0 0.0
    %1040 = vmatpush.msra.mxu0 0.0
    %1041 = vmatpush.msra.mxu0 0.0
    %1042 = vmatpush.msra.mxu0 0.0
    %1043 = vmatpush.msra.mxu0 0.0
    %1044 = vmatpush.msra.mxu0 %v891
    %1045 = vmatmul.f32.gmra.mxu0 %v235
    %v1046 = vpop.f32.mrf.mxu0
    %v1047 = vadd.f32 0.0, %v1046
    %1048 = vdwg.mxu0
    %v1049 = vmul.f32 %v1047, %v979
    %v1050 = vsel %vm177, %v1049, 0.0
    %v1051 = vrot.slane %v1050, 4
    %v1052 = vadd.f32 %v1050, %v1051
    %v1053 = vrot.slane %v1052, 2
    %v1054 = vadd.f32 %v1052, %v1053
    %v1055 = vrot.slane %v1054, 1
    %v1056 = vadd.f32 %v1054, %v1055
    %v1057 = vadd.f32 %v1028, %v1056
    %v1058 = vsel %vm980, %v1057, 0.0
    %v1059 = vadd.f32 %v971, %v1058
    %s1060 = scalar_lea.vmem %s0, 88
    %v1061 = vld [vmem:[%s1060] sm:$0xff]
    %v1062 = vld [vmem:[%s2 + $0xb] sm:$0x1]
    %v1063 = vld [vmem:[%s1 + $0xb] sm:$0x1]
    %v1064 = vperm.slane %v1063, 0
    %vm1065 = vcmp.eq.s32.totalorder %v28, %v1064
    %v1066 = vsel %vm1065, 1, 0
    %v1067 = vcvt.s32.f32 %v1066
    %vm1068 = vcmp.ne.f32.partialorder %v1062, 0.0
    %v1069 = vsel %vm177, %v1020, -inf
    %v1070 = vrot.slane %v1069, 4
    %v1071 = vmax.f32 %v1069, %v1070
    %v1072 = vrot.slane %v1071, 2
    %v1073 = vmax.f32 %v1071, %v1072
    %v1074 = vrot.slane %v1073, 1
    %v1075 = vmax.f32 %v1073, %v1074
    %v1076 = vsub.f32 %v1020, %v1075
    %v1077 = vmul.f32 %v1076, 1.442695
    %v1078 = vpow.pop %v1077
    %1079 = vmatpush.msra.mxu0 0.0
    %1080 = vmatpush.msra.mxu0 0.0
    %1081 = vmatpush.msra.mxu0 0.0
    %1082 = vmatpush.msra.mxu0 0.0
    %1083 = vmatpush.msra.mxu0 0.0
    %1084 = vmatpush.msra.mxu0 0.0
    %1085 = vmatpush.msra.mxu0 0.0
    %1086 = vmatpush.msra.mxu0 0.0
    %1087 = vmatpush.msra.mxu0 0.0
    %1088 = vmatpush.msra.mxu0 0.0
    %1089 = vmatpush.msra.mxu0 0.0
    %1090 = vmatpush.msra.mxu0 0.0
    %1091 = vmatpush.msra.mxu0 0.0
    %1092 = vmatpush.msra.mxu0 0.0
    %1093 = vmatpush.msra.mxu0 0.0
    %1094 = vmatpush.msra.mxu0 %v1078
    %1095 = vmatmul.f32.gmra.mxu0 %v189
    %v1096 = vpop.f32.mrf.mxu0
    %v1097 = vadd.f32 0.0, %v1096
    %1098 = vdwg.mxu0
    %v1099 = vmax.f32 %v1097, 1.1754944e-38
    %v1100 = vlog2.pop %v1099
    %v1101 = vmul.f32 %v1100, 0.6931472
    %v1102 = vadd.f32 %v1101, %v1075
    %v1103 = vadd.f32 %v1102, %v218
    %v1104 = vadd.f32 %v1103, %v1061
    %v1105 = vsel %vm1068, 1, 0
    %v1106 = vperm.slane %v1105, 0
    %vm1107 = vcmp.eq.s32.totalorder %v1106, 1
    %v1108 = vsel %vm1107, %v1104, %v1020
    %v1109 = vmul.f32 %v1061, %v1067
    %v1110 = vsel %vm177, %v1109, 0.0
    %v1111 = vrot.slane %v1110, 4
    %v1112 = vadd.f32 %v1110, %v1111
    %v1113 = vrot.slane %v1112, 2
    %v1114 = vadd.f32 %v1112, %v1113
    %v1115 = vrot.slane %v1114, 1
    %v1116 = vadd.f32 %v1114, %v1115
    %1117 = vmatpush.msra.mxu0 0.0
    %1118 = vmatpush.msra.mxu0 0.0
    %1119 = vmatpush.msra.mxu0 0.0
    %1120 = vmatpush.msra.mxu0 0.0
    %1121 = vmatpush.msra.mxu0 0.0
    %1122 = vmatpush.msra.mxu0 0.0
    %1123 = vmatpush.msra.mxu0 0.0
    %1124 = vmatpush.msra.mxu0 0.0
    %1125 = vmatpush.msra.mxu0 0.0
    %1126 = vmatpush.msra.mxu0 0.0
    %1127 = vmatpush.msra.mxu0 0.0
    %1128 = vmatpush.msra.mxu0 0.0
    %1129 = vmatpush.msra.mxu0 0.0
    %1130 = vmatpush.msra.mxu0 0.0
    %1131 = vmatpush.msra.mxu0 0.0
    %1132 = vmatpush.msra.mxu0 %v979
    %1133 = vmatmul.f32.gmra.mxu0 %v235
    %v1134 = vpop.f32.mrf.mxu0
    %v1135 = vadd.f32 0.0, %v1134
    %1136 = vdwg.mxu0
    %v1137 = vmul.f32 %v1135, %v1067
    %v1138 = vsel %vm177, %v1137, 0.0
    %v1139 = vrot.slane %v1138, 4
    %v1140 = vadd.f32 %v1138, %v1139
    %v1141 = vrot.slane %v1140, 2
    %v1142 = vadd.f32 %v1140, %v1141
    %v1143 = vrot.slane %v1142, 1
    %v1144 = vadd.f32 %v1142, %v1143
    %v1145 = vadd.f32 %v1116, %v1144
    %v1146 = vsel %vm1068, %v1145, 0.0
    %v1147 = vadd.f32 %v1059, %v1146
    %s1148 = scalar_lea.vmem %s0, 96
    %v1149 = vld [vmem:[%s1148] sm:$0xff]
    %v1150 = vld [vmem:[%s2 + $0xc] sm:$0x1]
    %v1151 = vld [vmem:[%s1 + $0xc] sm:$0x1]
    %v1152 = vperm.slane %v1151, 0
    %vm1153 = vcmp.eq.s32.totalorder %v28, %v1152
    %v1154 = vsel %vm1153, 1, 0
    %v1155 = vcvt.s32.f32 %v1154
    %vm1156 = vcmp.ne.f32.partialorder %v1150, 0.0
    %v1157 = vsel %vm177, %v1108, -inf
    %v1158 = vrot.slane %v1157, 4
    %v1159 = vmax.f32 %v1157, %v1158
    %v1160 = vrot.slane %v1159, 2
    %v1161 = vmax.f32 %v1159, %v1160
    %v1162 = vrot.slane %v1161, 1
    %v1163 = vmax.f32 %v1161, %v1162
    %v1164 = vsub.f32 %v1108, %v1163
    %v1165 = vmul.f32 %v1164, 1.442695
    %v1166 = vpow.pop %v1165
    %1167 = vmatpush.msra.mxu0 0.0
    %1168 = vmatpush.msra.mxu0 0.0
    %1169 = vmatpush.msra.mxu0 0.0
    %1170 = vmatpush.msra.mxu0 0.0
    %1171 = vmatpush.msra.mxu0 0.0
    %1172 = vmatpush.msra.mxu0 0.0
    %1173 = vmatpush.msra.mxu0 0.0
    %1174 = vmatpush.msra.mxu0 0.0
    %1175 = vmatpush.msra.mxu0 0.0
    %1176 = vmatpush.msra.mxu0 0.0
    %1177 = vmatpush.msra.mxu0 0.0
    %1178 = vmatpush.msra.mxu0 0.0
    %1179 = vmatpush.msra.mxu0 0.0
    %1180 = vmatpush.msra.mxu0 0.0
    %1181 = vmatpush.msra.mxu0 0.0
    %1182 = vmatpush.msra.mxu0 %v1166
    %1183 = vmatmul.f32.gmra.mxu0 %v189
    %v1184 = vpop.f32.mrf.mxu0
    %v1185 = vadd.f32 0.0, %v1184
    %1186 = vdwg.mxu0
    %v1187 = vmax.f32 %v1185, 1.1754944e-38
    %v1188 = vlog2.pop %v1187
    %v1189 = vmul.f32 %v1188, 0.6931472
    %v1190 = vadd.f32 %v1189, %v1163
    %v1191 = vadd.f32 %v1190, %v218
    %v1192 = vadd.f32 %v1191, %v1149
    %v1193 = vsel %vm1156, 1, 0
    %v1194 = vperm.slane %v1193, 0
    %vm1195 = vcmp.eq.s32.totalorder %v1194, 1
    %v1196 = vsel %vm1195, %v1192, %v1108
    %v1197 = vmul.f32 %v1149, %v1155
    %v1198 = vsel %vm177, %v1197, 0.0
    %v1199 = vrot.slane %v1198, 4
    %v1200 = vadd.f32 %v1198, %v1199
    %v1201 = vrot.slane %v1200, 2
    %v1202 = vadd.f32 %v1200, %v1201
    %v1203 = vrot.slane %v1202, 1
    %v1204 = vadd.f32 %v1202, %v1203
    %1205 = vmatpush.msra.mxu0 0.0
    %1206 = vmatpush.msra.mxu0 0.0
    %1207 = vmatpush.msra.mxu0 0.0
    %1208 = vmatpush.msra.mxu0 0.0
    %1209 = vmatpush.msra.mxu0 0.0
    %1210 = vmatpush.msra.mxu0 0.0
    %1211 = vmatpush.msra.mxu0 0.0
    %1212 = vmatpush.msra.mxu0 0.0
    %1213 = vmatpush.msra.mxu0 0.0
    %1214 = vmatpush.msra.mxu0 0.0
    %1215 = vmatpush.msra.mxu0 0.0
    %1216 = vmatpush.msra.mxu0 0.0
    %1217 = vmatpush.msra.mxu0 0.0
    %1218 = vmatpush.msra.mxu0 0.0
    %1219 = vmatpush.msra.mxu0 0.0
    %1220 = vmatpush.msra.mxu0 %v1067
    %1221 = vmatmul.f32.gmra.mxu0 %v235
    %v1222 = vpop.f32.mrf.mxu0
    %v1223 = vadd.f32 0.0, %v1222
    %1224 = vdwg.mxu0
    %v1225 = vmul.f32 %v1223, %v1155
    %v1226 = vsel %vm177, %v1225, 0.0
    %v1227 = vrot.slane %v1226, 4
    %v1228 = vadd.f32 %v1226, %v1227
    %v1229 = vrot.slane %v1228, 2
    %v1230 = vadd.f32 %v1228, %v1229
    %v1231 = vrot.slane %v1230, 1
    %v1232 = vadd.f32 %v1230, %v1231
    %v1233 = vadd.f32 %v1204, %v1232
    %v1234 = vsel %vm1156, %v1233, 0.0
    %v1235 = vadd.f32 %v1147, %v1234
    %s1236 = scalar_lea.vmem %s0, 104
    %v1237 = vld [vmem:[%s1236] sm:$0xff]
    %v1238 = vld [vmem:[%s2 + $0xd] sm:$0x1]
    %v1239 = vld [vmem:[%s1 + $0xd] sm:$0x1]
    %v1240 = vperm.slane %v1239, 0
    %vm1241 = vcmp.eq.s32.totalorder %v28, %v1240
    %v1242 = vsel %vm1241, 1, 0
    %v1243 = vcvt.s32.f32 %v1242
    %vm1244 = vcmp.ne.f32.partialorder %v1238, 0.0
    %v1245 = vsel %vm177, %v1196, -inf
    %v1246 = vrot.slane %v1245, 4
    %v1247 = vmax.f32 %v1245, %v1246
    %v1248 = vrot.slane %v1247, 2
    %v1249 = vmax.f32 %v1247, %v1248
    %v1250 = vrot.slane %v1249, 1
    %v1251 = vmax.f32 %v1249, %v1250
    %v1252 = vsub.f32 %v1196, %v1251
    %v1253 = vmul.f32 %v1252, 1.442695
    %v1254 = vpow.pop %v1253
    %1255 = vmatpush.msra.mxu0 0.0
    %1256 = vmatpush.msra.mxu0 0.0
    %1257 = vmatpush.msra.mxu0 0.0
    %1258 = vmatpush.msra.mxu0 0.0
    %1259 = vmatpush.msra.mxu0 0.0
    %1260 = vmatpush.msra.mxu0 0.0
    %1261 = vmatpush.msra.mxu0 0.0
    %1262 = vmatpush.msra.mxu0 0.0
    %1263 = vmatpush.msra.mxu0 0.0
    %1264 = vmatpush.msra.mxu0 0.0
    %1265 = vmatpush.msra.mxu0 0.0
    %1266 = vmatpush.msra.mxu0 0.0
    %1267 = vmatpush.msra.mxu0 0.0
    %1268 = vmatpush.msra.mxu0 0.0
    %1269 = vmatpush.msra.mxu0 0.0
    %1270 = vmatpush.msra.mxu0 %v1254
    %1271 = vmatmul.f32.gmra.mxu0 %v189
    %v1272 = vpop.f32.mrf.mxu0
    %v1273 = vadd.f32 0.0, %v1272
    %1274 = vdwg.mxu0
    %v1275 = vmax.f32 %v1273, 1.1754944e-38
    %v1276 = vlog2.pop %v1275
    %v1277 = vmul.f32 %v1276, 0.6931472
    %v1278 = vadd.f32 %v1277, %v1251
    %v1279 = vadd.f32 %v1278, %v218
    %v1280 = vadd.f32 %v1279, %v1237
    %v1281 = vsel %vm1244, 1, 0
    %v1282 = vperm.slane %v1281, 0
    %vm1283 = vcmp.eq.s32.totalorder %v1282, 1
    %v1284 = vsel %vm1283, %v1280, %v1196
    %v1285 = vmul.f32 %v1237, %v1243
    %v1286 = vsel %vm177, %v1285, 0.0
    %v1287 = vrot.slane %v1286, 4
    %v1288 = vadd.f32 %v1286, %v1287
    %v1289 = vrot.slane %v1288, 2
    %v1290 = vadd.f32 %v1288, %v1289
    %v1291 = vrot.slane %v1290, 1
    %v1292 = vadd.f32 %v1290, %v1291
    %1293 = vmatpush.msra.mxu0 0.0
    %1294 = vmatpush.msra.mxu0 0.0
    %1295 = vmatpush.msra.mxu0 0.0
    %1296 = vmatpush.msra.mxu0 0.0
    %1297 = vmatpush.msra.mxu0 0.0
    %1298 = vmatpush.msra.mxu0 0.0
    %1299 = vmatpush.msra.mxu0 0.0
    %1300 = vmatpush.msra.mxu0 0.0
    %1301 = vmatpush.msra.mxu0 0.0
    %1302 = vmatpush.msra.mxu0 0.0
    %1303 = vmatpush.msra.mxu0 0.0
    %1304 = vmatpush.msra.mxu0 0.0
    %1305 = vmatpush.msra.mxu0 0.0
    %1306 = vmatpush.msra.mxu0 0.0
    %1307 = vmatpush.msra.mxu0 0.0
    %1308 = vmatpush.msra.mxu0 %v1155
    %1309 = vmatmul.f32.gmra.mxu0 %v235
    %v1310 = vpop.f32.mrf.mxu0
    %v1311 = vadd.f32 0.0, %v1310
    %1312 = vdwg.mxu0
    %v1313 = vmul.f32 %v1311, %v1243
    %v1314 = vsel %vm177, %v1313, 0.0
    %v1315 = vrot.slane %v1314, 4
    %v1316 = vadd.f32 %v1314, %v1315
    %v1317 = vrot.slane %v1316, 2
    %v1318 = vadd.f32 %v1316, %v1317
    %v1319 = vrot.slane %v1318, 1
    %v1320 = vadd.f32 %v1318, %v1319
    %v1321 = vadd.f32 %v1292, %v1320
    %v1322 = vsel %vm1244, %v1321, 0.0
    %v1323 = vadd.f32 %v1235, %v1322
    %s1324 = scalar_lea.vmem %s0, 112
    %v1325 = vld [vmem:[%s1324] sm:$0xff]
    %v1326 = vld [vmem:[%s2 + $0xe] sm:$0x1]
    %v1327 = vld [vmem:[%s1 + $0xe] sm:$0x1]
    %v1328 = vperm.slane %v1327, 0
    %vm1329 = vcmp.eq.s32.totalorder %v28, %v1328
    %v1330 = vsel %vm1329, 1, 0
    %v1331 = vcvt.s32.f32 %v1330
    %vm1332 = vcmp.ne.f32.partialorder %v1326, 0.0
    %v1333 = vsel %vm177, %v1284, -inf
    %v1334 = vrot.slane %v1333, 4
    %v1335 = vmax.f32 %v1333, %v1334
    %v1336 = vrot.slane %v1335, 2
    %v1337 = vmax.f32 %v1335, %v1336
    %v1338 = vrot.slane %v1337, 1
    %v1339 = vmax.f32 %v1337, %v1338
    %v1340 = vsub.f32 %v1284, %v1339
    %v1341 = vmul.f32 %v1340, 1.442695
    %v1342 = vpow.pop %v1341
    %1343 = vmatpush.msra.mxu0 0.0
    %1344 = vmatpush.msra.mxu0 0.0
    %1345 = vmatpush.msra.mxu0 0.0
    %1346 = vmatpush.msra.mxu0 0.0
    %1347 = vmatpush.msra.mxu0 0.0
    %1348 = vmatpush.msra.mxu0 0.0
    %1349 = vmatpush.msra.mxu0 0.0
    %1350 = vmatpush.msra.mxu0 0.0
    %1351 = vmatpush.msra.mxu0 0.0
    %1352 = vmatpush.msra.mxu0 0.0
    %1353 = vmatpush.msra.mxu0 0.0
    %1354 = vmatpush.msra.mxu0 0.0
    %1355 = vmatpush.msra.mxu0 0.0
    %1356 = vmatpush.msra.mxu0 0.0
    %1357 = vmatpush.msra.mxu0 0.0
    %1358 = vmatpush.msra.mxu0 %v1342
    %1359 = vmatmul.f32.gmra.mxu0 %v189
    %v1360 = vpop.f32.mrf.mxu0
    %v1361 = vadd.f32 0.0, %v1360
    %1362 = vdwg.mxu0
    %v1363 = vmax.f32 %v1361, 1.1754944e-38
    %v1364 = vlog2.pop %v1363
    %v1365 = vmul.f32 %v1364, 0.6931472
    %v1366 = vadd.f32 %v1365, %v1339
    %v1367 = vadd.f32 %v1366, %v218
    %v1368 = vadd.f32 %v1367, %v1325
    %v1369 = vsel %vm1332, 1, 0
    %v1370 = vperm.slane %v1369, 0
    %vm1371 = vcmp.eq.s32.totalorder %v1370, 1
    %v1372 = vsel %vm1371, %v1368, %v1284
    %v1373 = vmul.f32 %v1325, %v1331
    %v1374 = vsel %vm177, %v1373, 0.0
    %v1375 = vrot.slane %v1374, 4
    %v1376 = vadd.f32 %v1374, %v1375
    %v1377 = vrot.slane %v1376, 2
    %v1378 = vadd.f32 %v1376, %v1377
    %v1379 = vrot.slane %v1378, 1
    %v1380 = vadd.f32 %v1378, %v1379
    %1381 = vmatpush.msra.mxu0 0.0
    %1382 = vmatpush.msra.mxu0 0.0
    %1383 = vmatpush.msra.mxu0 0.0
    %1384 = vmatpush.msra.mxu0 0.0
    %1385 = vmatpush.msra.mxu0 0.0
    %1386 = vmatpush.msra.mxu0 0.0
    %1387 = vmatpush.msra.mxu0 0.0
    %1388 = vmatpush.msra.mxu0 0.0
    %1389 = vmatpush.msra.mxu0 0.0
    %1390 = vmatpush.msra.mxu0 0.0
    %1391 = vmatpush.msra.mxu0 0.0
    %1392 = vmatpush.msra.mxu0 0.0
    %1393 = vmatpush.msra.mxu0 0.0
    %1394 = vmatpush.msra.mxu0 0.0
    %1395 = vmatpush.msra.mxu0 0.0
    %1396 = vmatpush.msra.mxu0 %v1243
    %1397 = vmatmul.f32.gmra.mxu0 %v235
    %v1398 = vpop.f32.mrf.mxu0
    %v1399 = vadd.f32 0.0, %v1398
    %1400 = vdwg.mxu0
    %v1401 = vmul.f32 %v1399, %v1331
    %v1402 = vsel %vm177, %v1401, 0.0
    %v1403 = vrot.slane %v1402, 4
    %v1404 = vadd.f32 %v1402, %v1403
    %v1405 = vrot.slane %v1404, 2
    %v1406 = vadd.f32 %v1404, %v1405
    %v1407 = vrot.slane %v1406, 1
    %v1408 = vadd.f32 %v1406, %v1407
    %v1409 = vadd.f32 %v1380, %v1408
    %v1410 = vsel %vm1332, %v1409, 0.0
    %v1411 = vadd.f32 %v1323, %v1410
    %s1412 = scalar_lea.vmem %s0, 120
    %v1413 = vld [vmem:[%s1412] sm:$0xff]
    %v1414 = vld [vmem:[%s2 + $0xf] sm:$0x1]
    %v1415 = vld [vmem:[%s1 + $0xf] sm:$0x1]
    %v1416 = vperm.slane %v1415, 0
    %vm1417 = vcmp.eq.s32.totalorder %v28, %v1416
    %v1418 = vsel %vm1417, 1, 0
    %v1419 = vcvt.s32.f32 %v1418
    %vm1420 = vcmp.ne.f32.partialorder %v1414, 0.0
    %v1421 = vsel %vm177, %v1372, -inf
    %v1422 = vrot.slane %v1421, 4
    %v1423 = vmax.f32 %v1421, %v1422
    %v1424 = vrot.slane %v1423, 2
    %v1425 = vmax.f32 %v1423, %v1424
    %v1426 = vrot.slane %v1425, 1
    %v1427 = vmax.f32 %v1425, %v1426
    %v1428 = vsub.f32 %v1372, %v1427
    %v1429 = vmul.f32 %v1428, 1.442695
    %v1430 = vpow.pop %v1429
    %1431 = vmatpush.msra.mxu0 0.0
    %1432 = vmatpush.msra.mxu0 0.0
    %1433 = vmatpush.msra.mxu0 0.0
    %1434 = vmatpush.msra.mxu0 0.0
    %1435 = vmatpush.msra.mxu0 0.0
    %1436 = vmatpush.msra.mxu0 0.0
    %1437 = vmatpush.msra.mxu0 0.0
    %1438 = vmatpush.msra.mxu0 0.0
    %1439 = vmatpush.msra.mxu0 0.0
    %1440 = vmatpush.msra.mxu0 0.0
    %1441 = vmatpush.msra.mxu0 0.0
    %1442 = vmatpush.msra.mxu0 0.0
    %1443 = vmatpush.msra.mxu0 0.0
    %1444 = vmatpush.msra.mxu0 0.0
    %1445 = vmatpush.msra.mxu0 0.0
    %1446 = vmatpush.msra.mxu0 %v1430
    %1447 = vmatmul.f32.gmra.mxu0 %v189
    %v1448 = vpop.f32.mrf.mxu0
    %v1449 = vadd.f32 0.0, %v1448
    %1450 = vdwg.mxu0
    %v1451 = vmax.f32 %v1449, 1.1754944e-38
    %v1452 = vlog2.pop %v1451
    %v1453 = vmul.f32 %v1452, 0.6931472
    %v1454 = vadd.f32 %v1453, %v1427
    %v1455 = vadd.f32 %v1454, %v218
    %v1456 = vadd.f32 %v1455, %v1413
    %v1457 = vsel %vm1420, 1, 0
    %v1458 = vperm.slane %v1457, 0
    %vm1459 = vcmp.eq.s32.totalorder %v1458, 1
    %v1460 = vsel %vm1459, %v1456, %v1372
    %v1461 = vmul.f32 %v1413, %v1419
    %v1462 = vsel %vm177, %v1461, 0.0
    %v1463 = vrot.slane %v1462, 4
    %v1464 = vadd.f32 %v1462, %v1463
    %v1465 = vrot.slane %v1464, 2
    %v1466 = vadd.f32 %v1464, %v1465
    %v1467 = vrot.slane %v1466, 1
    %v1468 = vadd.f32 %v1466, %v1467
    %1469 = vmatpush.msra.mxu0 0.0
    %1470 = vmatpush.msra.mxu0 0.0
    %1471 = vmatpush.msra.mxu0 0.0
    %1472 = vmatpush.msra.mxu0 0.0
    %1473 = vmatpush.msra.mxu0 0.0
    %1474 = vmatpush.msra.mxu0 0.0
    %1475 = vmatpush.msra.mxu0 0.0
    %1476 = vmatpush.msra.mxu0 0.0
    %1477 = vmatpush.msra.mxu0 0.0
    %1478 = vmatpush.msra.mxu0 0.0
    %1479 = vmatpush.msra.mxu0 0.0
    %1480 = vmatpush.msra.mxu0 0.0
    %1481 = vmatpush.msra.mxu0 0.0
    %1482 = vmatpush.msra.mxu0 0.0
    %1483 = vmatpush.msra.mxu0 0.0
    %1484 = vmatpush.msra.mxu0 %v1331
    %1485 = vmatmul.f32.gmra.mxu0 %v235
    %v1486 = vpop.f32.mrf.mxu0
    %v1487 = vadd.f32 0.0, %v1486
    %1488 = vdwg.mxu0
    %v1489 = vmul.f32 %v1487, %v1419
    %v1490 = vsel %vm177, %v1489, 0.0
    %v1491 = vrot.slane %v1490, 4
    %v1492 = vadd.f32 %v1490, %v1491
    %v1493 = vrot.slane %v1492, 2
    %v1494 = vadd.f32 %v1492, %v1493
    %v1495 = vrot.slane %v1494, 1
    %v1496 = vadd.f32 %v1494, %v1495
    %v1497 = vadd.f32 %v1468, %v1496
    %v1498 = vsel %vm1420, %v1497, 0.0
    %v1499 = vadd.f32 %v1411, %v1498
    %1500 = vst.msk [vmem:[#allocation2] sm:$0xff] %vm177, %v1460
    %1501 = vst.msk [vmem:[#allocation4] sm:$0xff] %vm177, %v1419
    %vm1502 = vcmask 57344
    %1503 = vst.msk [vmem:[#allocation3] sm:$0x1] %vm1502, %v1499
    // Predicated region
    $region34: #{tpu_custom_call.1} parent=1 // pred_check
      %p1504 = pneg %p29
    $region35: #{tpu_custom_call.1} parent=1 // pred_check_branch
      %1506 = sbr.rel (%p1504) target = $region37
    $region36: #{tpu_custom_call.1} parent=1 // pred_region
      %v1507 = vsel %vm177, %v1460, -inf
      %v1508 = vrot.slane %v1507, 4
      %v1509 = vmax.f32 %v1507, %v1508
      %v1510 = vrot.slane %v1509, 2
      %v1511 = vmax.f32 %v1509, %v1510
      %v1512 = vrot.slane %v1511, 1
      %v1513 = vmax.f32 %v1511, %v1512
      %v1514 = vsub.f32 %v1460, %v1513
      %v1515 = vmul.f32 %v1514, 1.442695
      %v1516 = vpow.pop %v1515
      %v1517 = vsel %vm177, %v1516, 0.0
      %v1518 = vrot.slane %v1517, 4
      %v1519 = vadd.f32 %v1517, %v1518
      %v1520 = vrot.slane %v1519, 2
      %v1521 = vadd.f32 %v1519, %v1520
      %v1522 = vrot.slane %v1521, 1
      %v1523 = vadd.f32 %v1521, %v1522
      %v1524 = vlog2.pop %v1523
      %v1525 = vmul.f32 %v1524, 0.6931472
      %v1526 = vadd.f32 %v1525, %v1513
      %v1527 = vsub.f32 %v1526, %v1499
      %1528 = vst.msk [vmem:[#allocation5] sm:$0x1] %vm1502, %v1527
    $region37: #{tpu_custom_call.1} parent=1 // pred_fallthru
      _
    // Predicated region
    $region38: #{tpu_custom_call.1} parent=1 // pred_check
      _
    $region39: #{tpu_custom_call.1} parent=1 // pred_check_branch
      %1530 = sbr.rel (0) target = $region41
    $region40: #{tpu_custom_call.1} parent=1 // pred_region
      %1532 = vsyncadd [#allocation6], 0
      %s1534 = sshll.u32 [#allocation5], 4
      %s1535 = int_to_ptr.vmem [resolvable:$true] %s1534
      %s1536 = sshll.u32 %s6, 4
      %s1537 = int_to_ptr.hbm [resolvable:$true] %s1536
      %1539 = dma.vmem_to_hbm [thread:$0]  %s1535, 16, %s1537, [#allocation6]
    $region41: #{tpu_custom_call.1} parent=1 // pred_fallthru
      _
    // Predicated region
    $region42: #{tpu_custom_call.1} parent=1 // pred_check
      _
    $region43: #{tpu_custom_call.1} parent=1 // pred_check_branch
      %1541 = sbr.rel (0) target = $region45
    $region44: #{tpu_custom_call.1} parent=1 // pred_region
      %1543 = dma.done [#allocation6], 16
    $region45: #{tpu_custom_call.1} parent=1 // pred_fallthru
      _
    %1544 = vsyncpa [#allocation6], 1

</llo_original>
